<compile_context>
chip_gen: v7x
topology: tpu7x:2x2x1
jax: 0.10.0
libtpu: 0.0.40
codegen_flags: <defaults>
</compile_context>

<pallas_src>
import functools
import math

import jax
import jax.numpy as jnp
from jax.experimental import pallas as pl
from jax.experimental.pallas import tpu as pltpu


def _round_up(x, m):
    return ((x + m - 1) // m) * m


# ----------------------------------------------------------------------------
# Pallas kernel: T GRU timesteps of one direction per grid step.
# ----------------------------------------------------------------------------
def _gru_chunk_kernel(gx_ref, len_ref, whh_ref, bhn_ref, out_ref, h_ref):
    """One chunk of T timesteps of a single GRU direction.

    gx_ref : (T, Bp, 3Hp) f32   precomputed x @ [W_ir|W_iz|W_in] + fused biases
    len_ref: (Bp, Hp)     i32   per-row sequence length, lane-broadcast
    whh_ref: (Hp, 3Hp)    bf16  fused hidden weights [W_hr|W_hz|W_hn]
    bhn_ref: (1, Hp)      f32   b_hn (applied inside the reset gate, per GRU definition)
    out_ref: (T, Bp, Hp)  f32   GRU outputs (zeroed for t >= length)
    h_ref  : (Bp, Hp)     f32   carried hidden state (scratch, persists across chunks)
    """
    c = pl.program_id(1)                      # chunk index along time
    T, Bp, _ = gx_ref.shape
    Hp = h_ref.shape[1]

    @pl.when(c == 0)
    def _():
        h_ref[...] = jnp.zeros_like(h_ref)

    # Hoisted out of the unrolled loop (JAX does not CSE broadcast_in_dim).
    whh = whh_ref[...]                                    # (Hp, 3Hp) bf16
    bhn = jnp.broadcast_to(bhn_ref[...], (Bp, Hp))        # (Bp, Hp)  f32
    lens = len_ref[...]                                   # (Bp, Hp)  i32
    t0 = c * T

    def step(i, h):
        gx = gx_ref[i]                                    # (Bp, 3Hp) f32
        # One fused MXU matmul per step: bf16 inputs, f32 accumulation.
        hh = jnp.dot(h.astype(jnp.bfloat16), whh,
                     preferred_element_type=jnp.float32)  # (Bp, 3Hp) f32
        r = jax.nn.sigmoid(gx[:, :Hp] + hh[:, :Hp])
        z = jax.nn.sigmoid(gx[:, Hp:2 * Hp] + hh[:, Hp:2 * Hp])
        n = jnp.tanh(gx[:, 2 * Hp:] + r * (hh[:, 2 * Hp:] + bhn))
        h_new = (1.0 - z) * n + z * h
        mask = (t0 + i) < lens                            # packed-sequence masking
        out_ref[i] = jnp.where(mask, h_new, 0.0)          # pad_packed -> zeros
        return jnp.where(mask, h_new, h)                  # freeze hidden past length

    h_ref[...] = jax.lax.fori_loop(0, T, step, h_ref[...], unroll=True)


def _gru_recurrence(gx, len_bcast, whh, bhn, *, T):
    """gx: (dirs, S_pad, Bp, 3Hp) f32; returns (dirs, S_pad, Bp, Hp) f32."""
    dirs, S_pad, Bp, threeHp = gx.shape
    Hp = threeHp // 3
    grid = (dirs, S_pad // T)
    return pl.pallas_call(
        _gru_chunk_kernel,
        out_shape=jax.ShapeDtypeStruct((dirs, S_pad, Bp, Hp), jnp.float32),
        grid_spec=pltpu.PrefetchScalarGridSpec(
            num_scalar_prefetch=0,
            grid=grid,
            in_specs=[
                pl.BlockSpec((None, T, Bp, threeHp), lambda d, c: (d, c, 0, 0)),
                pl.BlockSpec((Bp, Hp), lambda d, c: (0, 0)),
                pl.BlockSpec((None, Hp, threeHp), lambda d, c: (d, 0, 0)),
                pl.BlockSpec((None, 1, Hp), lambda d, c: (d, 0, 0)),
            ],
            out_specs=pl.BlockSpec((None, T, Bp, Hp), lambda d, c: (d, c, 0, 0)),
            scratch_shapes=[pltpu.VMEM((Bp, Hp), jnp.float32)],
        ),
        compiler_params=pltpu.CompilerParams(
            # Direction axis is independent -> "parallel" (megacore sharding on v7x).
            # Chunk axis carries the recurrence via the scratch -> "arbitrary".
            dimension_semantics=("parallel", "arbitrary")),
    )(gx, len_bcast, whh, bhn)


# ----------------------------------------------------------------------------
# Parameter fusion / padding (done once, outside the recurrence).
# ----------------------------------------------------------------------------
def _fuse_direction(p, H, Hp):
    """PyTorch-layout GRU params -> fused, (8,128)-padded kernel params."""
    w_ih, w_hh, b_ih, b_hh = p["w_ih"], p["w_hh"], p["b_ih"], p["b_hh"]
    wir, wiz, win = w_ih[:H].T, w_ih[H:2 * H].T, w_ih[2 * H:].T       # (D, H)
    whr, whz, whn = w_hh[:H].T, w_hh[H:2 * H].T, w_hh[2 * H:].T       # (H, H)
    bir, biz, bin_ = b_ih[:H], b_ih[H:2 * H], b_ih[2 * H:]
    bhr, bhz, bhn_ = b_hh[:H], b_hh[H:2 * H], b_hh[2 * H:]

    pad_c = lambda w: jnp.pad(w, ((0, 0), (0, Hp - H)))               # pad gate cols
    pad_v = lambda v: jnp.pad(v, (0, Hp - H))
    pad_hh = lambda w: jnp.pad(w, ((0, Hp - H), (0, Hp - H)))

    wi_fused = jnp.concatenate([pad_c(wir), pad_c(wiz), pad_c(win)], axis=1)   # (D, 3Hp)
    bi_fused = jnp.concatenate(
        [pad_v(bir + bhr), pad_v(biz + bhz), pad_v(bin_)], axis=0)             # (3Hp,)
    whh_fused = jnp.concatenate(
        [pad_hh(whr), pad_hh(whz), pad_hh(whn)], axis=1).astype(jnp.bfloat16)  # (Hp, 3Hp)
    bhn_pad = pad_v(bhn_).reshape(1, Hp)                                       # (1, Hp)
    return wi_fused, bi_fused, whh_fused, bhn_pad


# ----------------------------------------------------------------------------
# Glue (plain XLA): embedding gather, per-sequence reversal, padding, projection.
# ----------------------------------------------------------------------------
def _reverse_within_length(x_bsd, lengths):
    """Reverse each sequence within its length (content past length is irrelevant)."""
    B, S, _ = x_bsd.shape
    t = jnp.arange(S)[None, :]
    rev_idx = jnp.clip(lengths[:, None] - 1 - t, 0, S - 1)
    return jnp.take_along_axis(x_bsd, rev_idx[:, :, None], axis=1)


def _reverse_back_within_length(y_bsh, lengths):
    """Un-reverse GRU outputs; positions t >= length read the kernel's zeroed slots."""
    B, S, _ = y_bsh.shape
    t = jnp.arange(S)[None, :]
    valid = t < lengths[:, None]
    idx = jnp.where(valid, lengths[:, None] - 1 - t, t)   # invalid t -> its own (zero) slot
    return jnp.take_along_axis(y_bsh, idx[:, :, None], axis=1)


def _gru_bidir_layer(x_bsd, lengths, layer_params, use_bi_gru, time_chunk):
    B, S, D = x_bsd.shape
    H = layer_params["fwd"]["w_hh"].shape[1]
    Hp = _round_up(max(H, 1), 128)
    Bp = _round_up(max(B, 1), 8)
    T = min(time_chunk, _round_up(S, 8))
    S_pad = _round_up(S, T)

    dir_names = ["fwd", "bwd"] if use_bi_gru else ["fwd"]

    # Per-direction inputs in time-major layout (backward runs on reversed sequences).
    xs = [x_bsd]
    if use_bi_gru:
        xs.append(_reverse_within_length(x_bsd, lengths))
    x_d = jnp.stack(xs, axis=0)                       # (dirs, B, S, D)
    x_d = jnp.transpose(x_d, (0, 2, 1, 3))            # (dirs, S, B, D)
    x_d = jnp.pad(x_d, ((0, 0), (0, S_pad - S), (0, Bp - B), (0, 0)))

    wi, bi, whh, bhn = [], [], [], []
    for d in dir_names:
        wi_d, bi_d, whh_d, bhn_d = _fuse_direction(layer_params[d], H, Hp)
        wi.append(wi_d); bi.append(bi_d); whh.append(whh_d); bhn.append(bhn_d)
    wi = jnp.stack(wi)       # (dirs, D, 3Hp)  f32
    bi = jnp.stack(bi)       # (dirs, 3Hp)     f32
    whh = jnp.stack(whh)     # (dirs, Hp, 3Hp) bf16
    bhn = jnp.stack(bhn)     # (dirs, 1, Hp)   f32

    # Hoisted input projection: one big, well-shaped matmul for all timesteps.
    gx = jnp.einsum("dsbi,dio->dsbo", x_d, wi) + bi[:, None, None, :]

    len_pad = jnp.pad(lengths.astype(jnp.int32), (0, Bp - B))          # padded rows: len 0
    len_bcast = jnp.broadcast_to(len_pad[:, None], (Bp, Hp)).astype(jnp.int32)

    out = _gru_recurrence(gx, len_bcast, whh, bhn, T=T)   # (dirs, S_pad, Bp, Hp)
    out = out[:, :S, :B, :H]                              # un-pad
    out = jnp.transpose(out, (0, 2, 1, 3))                # (dirs, B, S, H)
    fwd = out[0]
    if use_bi_gru:
        bwd = _reverse_back_within_length(out[1], lengths)
        return fwd, bwd
    return fwd, None


def encoder_text_forward(params, x_tokens, lengths, *, use_bi_gru, num_layers,
                         max_len=None, time_chunk=16):
    """Equivalent of EncoderText.forward(x, lengths) -> (cap_emb, cap_len).

    Pass max_len = max(lengths) as a static Python int (from the data loader) to
    reproduce pad_packed_sequence exactly without a device->host sync.
    """
    lengths = jnp.asarray(lengths, jnp.int32)
    B, S = x_tokens.shape
    # Embedding lookup (data-dependent gather) kept in XLA glue.
    emb = jnp.take(params["embed"], x_tokens, axis=0).astype(jnp.float32)  # (B,S,word_dim)

    inp = emb
    for layer in range(num_layers):
        fwd, bwd = _gru_bidir_layer(inp, lengths, params["gru"][layer],
                                    use_bi_gru, time_chunk)
        inp = jnp.concatenate([fwd, bwd], axis=-1) if use_bi_gru else fwd

    if max_len is None:
        # Fallback preserves exact pad_packed semantics but forces a host sync;
        # prefer passing max_len as a static int.
        max_len = int(jax.device_get(jnp.max(lengths)))
    cap_emb = inp[:, :max_len, :]
    if use_bi_gru:
        h = cap_emb.shape[-1] // 2
        cap_emb = (cap_emb[:, :, :h] + cap_emb[:, :, h:]) / 2.0
    cap_len = lengths  # original batch order (enforce_sorted=False)
    return cap_emb, cap_len


# ----------------------------------------------------------------------------
# Deterministic parameter init (PyTorch nn.GRU / nn.Embedding conventions).
# ----------------------------------------------------------------------------
def _init_gru_dir(key, in_dim, hidden):
    stdv = 1.0 / math.sqrt(hidden)
    ks = jax.random.split(key, 4)
    u = lambda k, shape: jax.random.uniform(k, shape, jnp.float32, -stdv, stdv)
    return {
        "w_ih": u(ks[0], (3 * hidden, in_dim)),   # gate order [r|z|n], torch layout
        "w_hh": u(ks[1], (3 * hidden, hidden)),
        "b_ih": u(ks[2], (3 * hidden,)),
        "b_hh": u(ks[3], (3 * hidden,)),
    }


def init_encoder_text(key, vocab_size, word_dim, embed_size, num_layers, use_bi_gru):
    k_embed, k_gru = jax.random.split(key)
    params = {
        "embed": jax.random.uniform(k_embed, (vocab_size, word_dim), jnp.float32,
                                    -0.1, 0.1),
        "gru": [],
    }
    dirs = 2 if use_bi_gru else 1
    layer_keys = jax.random.split(k_gru, num_layers * dirs)
    for layer in range(num_layers):
        in_dim = word_dim if layer == 0 else embed_size * dirs
        entry = {"fwd": _init_gru_dir(layer_keys[layer * dirs], in_dim, embed_size)}
        if use_bi_gru:
            entry["bwd"] = _init_gru_dir(layer_keys[layer * dirs + 1], in_dim, embed_size)
        params["gru"].append(entry)
    return params


# ----------------------------------------------------------------------------
# Pure-JAX reference (mirrors torch GRU semantics) for a structural self-check.
# ----------------------------------------------------------------------------
def _run_dir_reference(x_bsd, p, lengths):
    B, S, _ = x_bsd.shape
    H = p["w_hh"].shape[1]
    w_ih, w_hh, b_ih, b_hh = p["w_ih"], p["w_hh"], p["b_ih"], p["b_hh"]

    def cell(h, inputs):
        x_t, t = inputs
        gi = x_t @ w_ih.T + b_ih
        gh = h @ w_hh.T + b_hh
        r = jax.nn.sigmoid(gi[:, :H] + gh[:, :H])
        z = jax.nn.sigmoid(gi[:, H:2 * H] + gh[:, H:2 * H])
        n = jnp.tanh(gi[:, 2 * H:] + r * gh[:, 2 * H:])
        h_new = (1.0 - z) * n + z * h
        mask = (t < lengths)[:, None]
        return jnp.where(mask, h_new, h), jnp.where(mask, h_new, 0.0)

    h0 = jnp.zeros((B, H), jnp.float32)
    xs = (jnp.transpose(x_bsd, (1, 0, 2)), jnp.arange(S))
    _, outs = jax.lax.scan(cell, h0, xs)
    return jnp.transpose(outs, (1, 0, 2))


def _encoder_text_reference(params, x_tokens, lengths, *, use_bi_gru, num_layers, max_len):
    lengths = jnp.asarray(lengths, jnp.int32)
    inp = jnp.take(params["embed"], x_tokens, axis=0).astype(jnp.float32)
    for layer in range(num_layers):
        p = params["gru"][layer]
        fwd = _run_dir_reference(inp, p["fwd"], lengths)
        if use_bi_gru:
            bwd_rev = _run_dir_reference(_reverse_within_length(inp, lengths),
                                         p["bwd"], lengths)
            bwd = _reverse_back_within_length(bwd_rev, lengths)
            inp = jnp.concatenate([fwd, bwd], axis=-1)
        else:
            inp = fwd
    cap = inp[:, :max_len, :]
    if use_bi_gru:
        h = cap.shape[-1] // 2
        cap = (cap[:, :, :h] + cap[:, :, h:]) / 2.0
    return cap, lengths


if __name__ == "__main__":
    vocab_size, word_dim, embed_size = 50, 32, 32
    num_layers, use_bi_gru = 1, True
    B, S = 2, 8

    key = jax.random.PRNGKey(0)
    k_tok, k_par = jax.random.split(key)
    x_tokens = jax.random.randint(k_tok, (B, S), 0, vocab_size, dtype=jnp.int32)
    lengths_list = [8, 5]
    lengths = jnp.array(lengths_list, dtype=jnp.int32)
    max_len = max(lengths_list)   # static host value -> no device->host sync

    params = init_encoder_text(k_par, vocab_size, word_dim, embed_size,
                               num_layers, use_bi_gru)

    cap_emb, cap_len = encoder_text_forward(
        params, x_tokens, lengths, use_bi_gru=use_bi_gru, num_layers=num_layers,
        max_len=max_len)
    jax.block_until_ready(cap_emb)
    jax.block_until_ready(cap_len)

    assert cap_emb.shape == (B, max_len, embed_size)
    assert cap_len.shape == (B,)

    # Structural self-check vs a pure-JAX reference (kernel uses bf16 hidden weights
    # with f32 accumulation, so allow a small tolerance).
    ref_emb, _ = _encoder_text_reference(
        params, x_tokens, lengths, use_bi_gru=use_bi_gru, num_layers=num_layers,
        max_len=max_len)
    err = float(jnp.max(jnp.abs(cap_emb - ref_emb)))
    assert err < 5e-2, f"mismatch vs pure-JAX reference: max abs err = {err}"

    print("KERNEL_OK")
</pallas_src>

<mosaic_0001>
module attributes {stable_mosaic.version = 11 : i64} {
  func.func @_gru_chunk_kernel(%arg0: i32, %arg1: i32, %arg2: memref<1x8x8x384xf32, #tpu.memory_space<vmem>>, %arg3: memref<8x128xi32, #tpu.memory_space<vmem>>, %arg4: memref<1x128x384xbf16, #tpu.memory_space<vmem>>, %arg5: memref<1x1x128xf32, #tpu.memory_space<vmem>>, %arg6: memref<1x8x8x128xf32, #tpu.memory_space<vmem>>, %arg7: memref<8x128xf32, #tpu.memory_space<vmem>>) attributes {dimension_semantics = [#tpu.dimension_semantics<parallel>, #tpu.dimension_semantics<arbitrary>], iteration_bounds = array<i64: 2, 1>, scalar_prefetch = 0 : i64, scratch_operands = 1 : i64, tpu.core_type = #tpu.core_type<tc>, window_params = [{transform_indices = @transform_0, window_bounds = array<i64: 1, 8, 8, 384>}, {pipeline_mode = #tpu.pipeline_mode<synchronous>, transform_indices = @transform_1, window_bounds = array<i64: 8, 128>}, {transform_indices = @transform_2, window_bounds = array<i64: 1, 128, 384>}, {transform_indices = @transform_3, window_bounds = array<i64: 1, 1, 128>}, {transform_indices = @transform_4, window_bounds = array<i64: 1, 8, 8, 128>}]} {
    %c0_i32 = arith.constant 0 : i32
    %0 = arith.cmpi eq, %arg1, %c0_i32 : i32
    %1 = arith.extui %0 : i1 to i32
    %c0_i32_0 = arith.constant 0 : i32
    %2 = arith.cmpi ne, %1, %c0_i32_0 : i32
    scf.if %2 {
      %cst_101 = arith.constant 0.000000e+00 : f32
      %349 = vector.broadcast %cst_101 : f32 to vector<8x128xf32>
      %c0_102 = arith.constant 0 : index
      %c0_103 = arith.constant 0 : index
      %350 = vector.load %arg7[%c0_102, %c0_103] : memref<8x128xf32, #tpu.memory_space<vmem>>, vector<8x128xf32>
      tpu.vector_store %arg7[%c0_102, %c0_103], %349 {strides = array<i32>} : memref<8x128xf32, #tpu.memory_space<vmem>>, vector<8x128xf32>,
    } else {
    }
    %c0 = arith.constant 0 : index
    %c0_1 = arith.constant 0 : index
    %c0_2 = arith.constant 0 : index
    %3 = vector.load %arg4[%c0, %c0_1, %c0_2] : memref<1x128x384xbf16, #tpu.memory_space<vmem>>, vector<1x128x384xbf16>
    %4 = vector.shape_cast %3 : vector<1x128x384xbf16> to vector<128x384xbf16>
    %c0_3 = arith.constant 0 : index
    %c0_4 = arith.constant 0 : index
    %c0_5 = arith.constant 0 : index
    %5 = vector.load %arg5[%c0_3, %c0_4, %c0_5] : memref<1x1x128xf32, #tpu.memory_space<vmem>>, vector<1x1x128xf32>
    %6 = vector.shape_cast %5 : vector<1x1x128xf32> to vector<1x128xf32>
    %7 = vector.shape_cast %6 : vector<1x128xf32> to vector<1x128xf32>
    %8 = vector.broadcast %7 : vector<1x128xf32> to vector<8x128xf32>
    %c0_6 = arith.constant 0 : index
    %c0_7 = arith.constant 0 : index
    %9 = vector.load %arg3[%c0_6, %c0_7] : memref<8x128xi32, #tpu.memory_space<vmem>>, vector<8x128xi32>
    %c8_i32 = arith.constant 8 : i32
    %10 = arith.muli %arg1, %c8_i32 : i32
    %c0_8 = arith.constant 0 : index
    %c0_9 = arith.constant 0 : index
    %11 = vector.load %arg7[%c0_8, %c0_9] : memref<8x128xf32, #tpu.memory_space<vmem>>, vector<8x128xf32>
    %c0_i32_10 = arith.constant 0 : i32
    %c0_11 = arith.constant 0 : index
    %12 = arith.index_cast %c0_i32_10 : i32 to index
    %c0_12 = arith.constant 0 : index
    %c0_13 = arith.constant 0 : index
    %13 = vector.load %arg2[%c0_11, %12, %c0_12, %c0_13] : memref<1x8x8x384xf32, #tpu.memory_space<vmem>>, vector<1x1x8x384xf32>
    %14 = vector.shape_cast %13 : vector<1x1x8x384xf32> to vector<8x384xf32>
    %15 = arith.truncf %11 : vector<8x128xf32> to vector<8x128xbf16>
    %cst = arith.constant dense<0.000000e+00> : vector<8x384xf32>
    %16 = tpu.matmul %15, %4, %cst {dimension_numbers = #tpu.dot_dimension_numbers<[1], [0], [0], [1], [0, 0, 1, 1], [], []>} : vector<8x128xbf16>, vector<128x384xbf16>, vector<8x384xf32> -> vector<8x384xf32>
    %17 = vector.extract_strided_slice %14 {offsets = [0, 0], sizes = [8, 128], strides = [1, 1]} : vector<8x384xf32> to vector<8x128xf32>
    %18 = vector.extract_strided_slice %16 {offsets = [0, 0], sizes = [8, 128], strides = [1, 1]} : vector<8x384xf32> to vector<8x128xf32>
    %19 = arith.addf %17, %18 : vector<8x128xf32>
    %20 = arith.negf %19 : vector<8x128xf32>
    %21 = math.exp %20 : vector<8x128xf32>
    %cst_14 = arith.constant 1.000000e+00 : f32
    %22 = vector.broadcast %cst_14 : f32 to vector<8x128xf32>
    %23 = arith.addf %22, %21 : vector<8x128xf32>
    %24 = arith.divf %22, %23 : vector<8x128xf32>
    %25 = vector.extract_strided_slice %14 {offsets = [0, 128], sizes = [8, 128], strides = [1, 1]} : vector<8x384xf32> to vector<8x128xf32>
    %26 = vector.extract_strided_slice %16 {offsets = [0, 128], sizes = [8, 128], strides = [1, 1]} : vector<8x384xf32> to vector<8x128xf32>
    %27 = arith.addf %25, %26 : vector<8x128xf32>
    %28 = arith.negf %27 : vector<8x128xf32>
    %29 = math.exp %28 : vector<8x128xf32>
    %cst_15 = arith.constant 1.000000e+00 : f32
    %30 = vector.broadcast %cst_15 : f32 to vector<8x128xf32>
    %31 = arith.addf %30, %29 : vector<8x128xf32>
    %32 = arith.divf %30, %31 : vector<8x128xf32>
    %33 = vector.extract_strided_slice %14 {offsets = [0, 256], sizes = [8, 128], strides = [1, 1]} : vector<8x384xf32> to vector<8x128xf32>
    %34 = vector.extract_strided_slice %16 {offsets = [0, 256], sizes = [8, 128], strides = [1, 1]} : vector<8x384xf32> to vector<8x128xf32>
    %35 = arith.addf %34, %8 : vector<8x128xf32>
    %36 = arith.mulf %24, %35 : vector<8x128xf32>
    %37 = arith.addf %33, %36 : vector<8x128xf32>
    %38 = math.tanh %37 : vector<8x128xf32>
    %cst_16 = arith.constant 1.000000e+00 : f32
    %39 = vector.broadcast %cst_16 : f32 to vector<8x128xf32>
    %40 = arith.subf %39, %32 : vector<8x128xf32>
    %41 = arith.mulf %40, %38 : vector<8x128xf32>
    %42 = arith.mulf %32, %11 : vector<8x128xf32>
    %43 = arith.addf %41, %42 : vector<8x128xf32>
    %44 = arith.addi %10, %c0_i32_10 : i32
    %45 = vector.broadcast %44 : i32 to vector<8x128xi32>
    %46 = arith.cmpi slt, %45, %9 : vector<8x128xi32>
    %cst_17 = arith.constant 0.000000e+00 : f32
    %47 = vector.broadcast %cst_17 : f32 to vector<8x128xf32>
    %48 = arith.select %46, %43, %47 : vector<8x128xi1>, vector<8x128xf32>
    %c0_18 = arith.constant 0 : index
    %49 = arith.index_cast %c0_i32_10 : i32 to index
    %c0_19 = arith.constant 0 : index
    %c0_20 = arith.constant 0 : index
    %50 = vector.load %arg6[%c0_18, %49, %c0_19, %c0_20] : memref<1x8x8x128xf32, #tpu.memory_space<vmem>>, vector<1x1x8x128xf32>
    %51 = vector.shape_cast %50 : vector<1x1x8x128xf32> to vector<8x128xf32>
    %52 = vector.shape_cast %48 : vector<8x128xf32> to vector<1x1x8x128xf32>
    tpu.vector_store %arg6[%c0_18, %49, %c0_19, %c0_20], %52 {strides = array<i32>} : memref<1x8x8x128xf32, #tpu.memory_space<vmem>>, vector<1x1x8x128xf32>,
    %53 = arith.select %46, %43, %11 : vector<8x128xi1>, vector<8x128xf32>
    %c1_i32 = arith.constant 1 : i32
    %c0_21 = arith.constant 0 : index
    %54 = arith.index_cast %c1_i32 : i32 to index
    %c0_22 = arith.constant 0 : index
    %c0_23 = arith.constant 0 : index
    %55 = vector.load %arg2[%c0_21, %54, %c0_22, %c0_23] : memref<1x8x8x384xf32, #tpu.memory_space<vmem>>, vector<1x1x8x384xf32>
    %56 = vector.shape_cast %55 : vector<1x1x8x384xf32> to vector<8x384xf32>
    %57 = arith.truncf %53 : vector<8x128xf32> to vector<8x128xbf16>
    %cst_24 = arith.constant dense<0.000000e+00> : vector<8x384xf32>
    %58 = tpu.matmul %57, %4, %cst_24 {dimension_numbers = #tpu.dot_dimension_numbers<[1], [0], [0], [1], [0, 0, 1, 1], [], []>} : vector<8x128xbf16>, vector<128x384xbf16>, vector<8x384xf32> -> vector<8x384xf32>
    %59 = vector.extract_strided_slice %56 {offsets = [0, 0], sizes = [8, 128], strides = [1, 1]} : vector<8x384xf32> to vector<8x128xf32>
    %60 = vector.extract_strided_slice %58 {offsets = [0, 0], sizes = [8, 128], strides = [1, 1]} : vector<8x384xf32> to vector<8x128xf32>
    %61 = arith.addf %59, %60 : vector<8x128xf32>
    %62 = arith.negf %61 : vector<8x128xf32>
    %63 = math.exp %62 : vector<8x128xf32>
    %cst_25 = arith.constant 1.000000e+00 : f32
    %64 = vector.broadcast %cst_25 : f32 to vector<8x128xf32>
    %65 = arith.addf %64, %63 : vector<8x128xf32>
    %66 = arith.divf %64, %65 : vector<8x128xf32>
    %67 = vector.extract_strided_slice %56 {offsets = [0, 128], sizes = [8, 128], strides = [1, 1]} : vector<8x384xf32> to vector<8x128xf32>
    %68 = vector.extract_strided_slice %58 {offsets = [0, 128], sizes = [8, 128], strides = [1, 1]} : vector<8x384xf32> to vector<8x128xf32>
    %69 = arith.addf %67, %68 : vector<8x128xf32>
    %70 = arith.negf %69 : vector<8x128xf32>
    %71 = math.exp %70 : vector<8x128xf32>
    %cst_26 = arith.constant 1.000000e+00 : f32
    %72 = vector.broadcast %cst_26 : f32 to vector<8x128xf32>
    %73 = arith.addf %72, %71 : vector<8x128xf32>
    %74 = arith.divf %72, %73 : vector<8x128xf32>
    %75 = vector.extract_strided_slice %56 {offsets = [0, 256], sizes = [8, 128], strides = [1, 1]} : vector<8x384xf32> to vector<8x128xf32>
    %76 = vector.extract_strided_slice %58 {offsets = [0, 256], sizes = [8, 128], strides = [1, 1]} : vector<8x384xf32> to vector<8x128xf32>
    %77 = arith.addf %76, %8 : vector<8x128xf32>
    %78 = arith.mulf %66, %77 : vector<8x128xf32>
    %79 = arith.addf %75, %78 : vector<8x128xf32>
    %80 = math.tanh %79 : vector<8x128xf32>
    %cst_27 = arith.constant 1.000000e+00 : f32
    %81 = vector.broadcast %cst_27 : f32 to vector<8x128xf32>
    %82 = arith.subf %81, %74 : vector<8x128xf32>
    %83 = arith.mulf %82, %80 : vector<8x128xf32>
    %84 = arith.mulf %74, %53 : vector<8x128xf32>
    %85 = arith.addf %83, %84 : vector<8x128xf32>
    %86 = arith.addi %10, %c1_i32 : i32
    %87 = vector.broadcast %86 : i32 to vector<8x128xi32>
    %88 = arith.cmpi slt, %87, %9 : vector<8x128xi32>
    %cst_28 = arith.constant 0.000000e+00 : f32
    %89 = vector.broadcast %cst_28 : f32 to vector<8x128xf32>
    %90 = arith.select %88, %85, %89 : vector<8x128xi1>, vector<8x128xf32>
    %c0_29 = arith.constant 0 : index
    %91 = arith.index_cast %c1_i32 : i32 to index
    %c0_30 = arith.constant 0 : index
    %c0_31 = arith.constant 0 : index
    %92 = vector.load %arg6[%c0_29, %91, %c0_30, %c0_31] : memref<1x8x8x128xf32, #tpu.memory_space<vmem>>, vector<1x1x8x128xf32>
    %93 = vector.shape_cast %92 : vector<1x1x8x128xf32> to vector<8x128xf32>
    %94 = vector.shape_cast %90 : vector<8x128xf32> to vector<1x1x8x128xf32>
    tpu.vector_store %arg6[%c0_29, %91, %c0_30, %c0_31], %94 {strides = array<i32>} : memref<1x8x8x128xf32, #tpu.memory_space<vmem>>, vector<1x1x8x128xf32>,
    %95 = arith.select %88, %85, %53 : vector<8x128xi1>, vector<8x128xf32>
    %c2_i32 = arith.constant 2 : i32
    %c0_32 = arith.constant 0 : index
    %96 = arith.index_cast %c2_i32 : i32 to index
    %c0_33 = arith.constant 0 : index
    %c0_34 = arith.constant 0 : index
    %97 = vector.load %arg2[%c0_32, %96, %c0_33, %c0_34] : memref<1x8x8x384xf32, #tpu.memory_space<vmem>>, vector<1x1x8x384xf32>
    %98 = vector.shape_cast %97 : vector<1x1x8x384xf32> to vector<8x384xf32>
    %99 = arith.truncf %95 : vector<8x128xf32> to vector<8x128xbf16>
    %cst_35 = arith.constant dense<0.000000e+00> : vector<8x384xf32>
    %100 = tpu.matmul %99, %4, %cst_35 {dimension_numbers = #tpu.dot_dimension_numbers<[1], [0], [0], [1], [0, 0, 1, 1], [], []>} : vector<8x128xbf16>, vector<128x384xbf16>, vector<8x384xf32> -> vector<8x384xf32>
    %101 = vector.extract_strided_slice %98 {offsets = [0, 0], sizes = [8, 128], strides = [1, 1]} : vector<8x384xf32> to vector<8x128xf32>
    %102 = vector.extract_strided_slice %100 {offsets = [0, 0], sizes = [8, 128], strides = [1, 1]} : vector<8x384xf32> to vector<8x128xf32>
    %103 = arith.addf %101, %102 : vector<8x128xf32>
    %104 = arith.negf %103 : vector<8x128xf32>
    %105 = math.exp %104 : vector<8x128xf32>
    %cst_36 = arith.constant 1.000000e+00 : f32
    %106 = vector.broadcast %cst_36 : f32 to vector<8x128xf32>
    %107 = arith.addf %106, %105 : vector<8x128xf32>
    %108 = arith.divf %106, %107 : vector<8x128xf32>
    %109 = vector.extract_strided_slice %98 {offsets = [0, 128], sizes = [8, 128], strides = [1, 1]} : vector<8x384xf32> to vector<8x128xf32>
    %110 = vector.extract_strided_slice %100 {offsets = [0, 128], sizes = [8, 128], strides = [1, 1]} : vector<8x384xf32> to vector<8x128xf32>
    %111 = arith.addf %109, %110 : vector<8x128xf32>
    %112 = arith.negf %111 : vector<8x128xf32>
    %113 = math.exp %112 : vector<8x128xf32>
    %cst_37 = arith.constant 1.000000e+00 : f32
    %114 = vector.broadcast %cst_37 : f32 to vector<8x128xf32>
    %115 = arith.addf %114, %113 : vector<8x128xf32>
    %116 = arith.divf %114, %115 : vector<8x128xf32>
    %117 = vector.extract_strided_slice %98 {offsets = [0, 256], sizes = [8, 128], strides = [1, 1]} : vector<8x384xf32> to vector<8x128xf32>
    %118 = vector.extract_strided_slice %100 {offsets = [0, 256], sizes = [8, 128], strides = [1, 1]} : vector<8x384xf32> to vector<8x128xf32>
    %119 = arith.addf %118, %8 : vector<8x128xf32>
    %120 = arith.mulf %108, %119 : vector<8x128xf32>
    %121 = arith.addf %117, %120 : vector<8x128xf32>
    %122 = math.tanh %121 : vector<8x128xf32>
    %cst_38 = arith.constant 1.000000e+00 : f32
    %123 = vector.broadcast %cst_38 : f32 to vector<8x128xf32>
    %124 = arith.subf %123, %116 : vector<8x128xf32>
    %125 = arith.mulf %124, %122 : vector<8x128xf32>
    %126 = arith.mulf %116, %95 : vector<8x128xf32>
    %127 = arith.addf %125, %126 : vector<8x128xf32>
    %128 = arith.addi %10, %c2_i32 : i32
    %129 = vector.broadcast %128 : i32 to vector<8x128xi32>
    %130 = arith.cmpi slt, %129, %9 : vector<8x128xi32>
    %cst_39 = arith.constant 0.000000e+00 : f32
    %131 = vector.broadcast %cst_39 : f32 to vector<8x128xf32>
    %132 = arith.select %130, %127, %131 : vector<8x128xi1>, vector<8x128xf32>
    %c0_40 = arith.constant 0 : index
    %133 = arith.index_cast %c2_i32 : i32 to index
    %c0_41 = arith.constant 0 : index
    %c0_42 = arith.constant 0 : index
    %134 = vector.load %arg6[%c0_40, %133, %c0_41, %c0_42] : memref<1x8x8x128xf32, #tpu.memory_space<vmem>>, vector<1x1x8x128xf32>
    %135 = vector.shape_cast %134 : vector<1x1x8x128xf32> to vector<8x128xf32>
    %136 = vector.shape_cast %132 : vector<8x128xf32> to vector<1x1x8x128xf32>
    tpu.vector_store %arg6[%c0_40, %133, %c0_41, %c0_42], %136 {strides = array<i32>} : memref<1x8x8x128xf32, #tpu.memory_space<vmem>>, vector<1x1x8x128xf32>,
    %137 = arith.select %130, %127, %95 : vector<8x128xi1>, vector<8x128xf32>
    %c3_i32 = arith.constant 3 : i32
    %c0_43 = arith.constant 0 : index
    %138 = arith.index_cast %c3_i32 : i32 to index
    %c0_44 = arith.constant 0 : index
    %c0_45 = arith.constant 0 : index
    %139 = vector.load %arg2[%c0_43, %138, %c0_44, %c0_45] : memref<1x8x8x384xf32, #tpu.memory_space<vmem>>, vector<1x1x8x384xf32>
    %140 = vector.shape_cast %139 : vector<1x1x8x384xf32> to vector<8x384xf32>
    %141 = arith.truncf %137 : vector<8x128xf32> to vector<8x128xbf16>
    %cst_46 = arith.constant dense<0.000000e+00> : vector<8x384xf32>
    %142 = tpu.matmul %141, %4, %cst_46 {dimension_numbers = #tpu.dot_dimension_numbers<[1], [0], [0], [1], [0, 0, 1, 1], [], []>} : vector<8x128xbf16>, vector<128x384xbf16>, vector<8x384xf32> -> vector<8x384xf32>
    %143 = vector.extract_strided_slice %140 {offsets = [0, 0], sizes = [8, 128], strides = [1, 1]} : vector<8x384xf32> to vector<8x128xf32>
    %144 = vector.extract_strided_slice %142 {offsets = [0, 0], sizes = [8, 128], strides = [1, 1]} : vector<8x384xf32> to vector<8x128xf32>
    %145 = arith.addf %143, %144 : vector<8x128xf32>
    %146 = arith.negf %145 : vector<8x128xf32>
    %147 = math.exp %146 : vector<8x128xf32>
    %cst_47 = arith.constant 1.000000e+00 : f32
    %148 = vector.broadcast %cst_47 : f32 to vector<8x128xf32>
    %149 = arith.addf %148, %147 : vector<8x128xf32>
    %150 = arith.divf %148, %149 : vector<8x128xf32>
    %151 = vector.extract_strided_slice %140 {offsets = [0, 128], sizes = [8, 128], strides = [1, 1]} : vector<8x384xf32> to vector<8x128xf32>
    %152 = vector.extract_strided_slice %142 {offsets = [0, 128], sizes = [8, 128], strides = [1, 1]} : vector<8x384xf32> to vector<8x128xf32>
    %153 = arith.addf %151, %152 : vector<8x128xf32>
    %154 = arith.negf %153 : vector<8x128xf32>
    %155 = math.exp %154 : vector<8x128xf32>
    %cst_48 = arith.constant 1.000000e+00 : f32
    %156 = vector.broadcast %cst_48 : f32 to vector<8x128xf32>
    %157 = arith.addf %156, %155 : vector<8x128xf32>
    %158 = arith.divf %156, %157 : vector<8x128xf32>
    %159 = vector.extract_strided_slice %140 {offsets = [0, 256], sizes = [8, 128], strides = [1, 1]} : vector<8x384xf32> to vector<8x128xf32>
    %160 = vector.extract_strided_slice %142 {offsets = [0, 256], sizes = [8, 128], strides = [1, 1]} : vector<8x384xf32> to vector<8x128xf32>
    %161 = arith.addf %160, %8 : vector<8x128xf32>
    %162 = arith.mulf %150, %161 : vector<8x128xf32>
    %163 = arith.addf %159, %162 : vector<8x128xf32>
    %164 = math.tanh %163 : vector<8x128xf32>
    %cst_49 = arith.constant 1.000000e+00 : f32
    %165 = vector.broadcast %cst_49 : f32 to vector<8x128xf32>
    %166 = arith.subf %165, %158 : vector<8x128xf32>
    %167 = arith.mulf %166, %164 : vector<8x128xf32>
    %168 = arith.mulf %158, %137 : vector<8x128xf32>
    %169 = arith.addf %167, %168 : vector<8x128xf32>
    %170 = arith.addi %10, %c3_i32 : i32
    %171 = vector.broadcast %170 : i32 to vector<8x128xi32>
    %172 = arith.cmpi slt, %171, %9 : vector<8x128xi32>
    %cst_50 = arith.constant 0.000000e+00 : f32
    %173 = vector.broadcast %cst_50 : f32 to vector<8x128xf32>
    %174 = arith.select %172, %169, %173 : vector<8x128xi1>, vector<8x128xf32>
    %c0_51 = arith.constant 0 : index
    %175 = arith.index_cast %c3_i32 : i32 to index
    %c0_52 = arith.constant 0 : index
    %c0_53 = arith.constant 0 : index
    %176 = vector.load %arg6[%c0_51, %175, %c0_52, %c0_53] : memref<1x8x8x128xf32, #tpu.memory_space<vmem>>, vector<1x1x8x128xf32>
    %177 = vector.shape_cast %176 : vector<1x1x8x128xf32> to vector<8x128xf32>
    %178 = vector.shape_cast %174 : vector<8x128xf32> to vector<1x1x8x128xf32>
    tpu.vector_store %arg6[%c0_51, %175, %c0_52, %c0_53], %178 {strides = array<i32>} : memref<1x8x8x128xf32, #tpu.memory_space<vmem>>, vector<1x1x8x128xf32>,
    %179 = arith.select %172, %169, %137 : vector<8x128xi1>, vector<8x128xf32>
    %c4_i32 = arith.constant 4 : i32
    %c0_54 = arith.constant 0 : index
    %180 = arith.index_cast %c4_i32 : i32 to index
    %c0_55 = arith.constant 0 : index
    %c0_56 = arith.constant 0 : index
    %181 = vector.load %arg2[%c0_54, %180, %c0_55, %c0_56] : memref<1x8x8x384xf32, #tpu.memory_space<vmem>>, vector<1x1x8x384xf32>
    %182 = vector.shape_cast %181 : vector<1x1x8x384xf32> to vector<8x384xf32>
    %183 = arith.truncf %179 : vector<8x128xf32> to vector<8x128xbf16>
    %cst_57 = arith.constant dense<0.000000e+00> : vector<8x384xf32>
    %184 = tpu.matmul %183, %4, %cst_57 {dimension_numbers = #tpu.dot_dimension_numbers<[1], [0], [0], [1], [0, 0, 1, 1], [], []>} : vector<8x128xbf16>, vector<128x384xbf16>, vector<8x384xf32> -> vector<8x384xf32>
    %185 = vector.extract_strided_slice %182 {offsets = [0, 0], sizes = [8, 128], strides = [1, 1]} : vector<8x384xf32> to vector<8x128xf32>
    %186 = vector.extract_strided_slice %184 {offsets = [0, 0], sizes = [8, 128], strides = [1, 1]} : vector<8x384xf32> to vector<8x128xf32>
    %187 = arith.addf %185, %186 : vector<8x128xf32>
    %188 = arith.negf %187 : vector<8x128xf32>
    %189 = math.exp %188 : vector<8x128xf32>
    %cst_58 = arith.constant 1.000000e+00 : f32
    %190 = vector.broadcast %cst_58 : f32 to vector<8x128xf32>
    %191 = arith.addf %190, %189 : vector<8x128xf32>
    %192 = arith.divf %190, %191 : vector<8x128xf32>
    %193 = vector.extract_strided_slice %182 {offsets = [0, 128], sizes = [8, 128], strides = [1, 1]} : vector<8x384xf32> to vector<8x128xf32>
    %194 = vector.extract_strided_slice %184 {offsets = [0, 128], sizes = [8, 128], strides = [1, 1]} : vector<8x384xf32> to vector<8x128xf32>
    %195 = arith.addf %193, %194 : vector<8x128xf32>
    %196 = arith.negf %195 : vector<8x128xf32>
    %197 = math.exp %196 : vector<8x128xf32>
    %cst_59 = arith.constant 1.000000e+00 : f32
    %198 = vector.broadcast %cst_59 : f32 to vector<8x128xf32>
    %199 = arith.addf %198, %197 : vector<8x128xf32>
    %200 = arith.divf %198, %199 : vector<8x128xf32>
    %201 = vector.extract_strided_slice %182 {offsets = [0, 256], sizes = [8, 128], strides = [1, 1]} : vector<8x384xf32> to vector<8x128xf32>
    %202 = vector.extract_strided_slice %184 {offsets = [0, 256], sizes = [8, 128], strides = [1, 1]} : vector<8x384xf32> to vector<8x128xf32>
    %203 = arith.addf %202, %8 : vector<8x128xf32>
    %204 = arith.mulf %192, %203 : vector<8x128xf32>
    %205 = arith.addf %201, %204 : vector<8x128xf32>
    %206 = math.tanh %205 : vector<8x128xf32>
    %cst_60 = arith.constant 1.000000e+00 : f32
    %207 = vector.broadcast %cst_60 : f32 to vector<8x128xf32>
    %208 = arith.subf %207, %200 : vector<8x128xf32>
    %209 = arith.mulf %208, %206 : vector<8x128xf32>
    %210 = arith.mulf %200, %179 : vector<8x128xf32>
    %211 = arith.addf %209, %210 : vector<8x128xf32>
    %212 = arith.addi %10, %c4_i32 : i32
    %213 = vector.broadcast %212 : i32 to vector<8x128xi32>
    %214 = arith.cmpi slt, %213, %9 : vector<8x128xi32>
    %cst_61 = arith.constant 0.000000e+00 : f32
    %215 = vector.broadcast %cst_61 : f32 to vector<8x128xf32>
    %216 = arith.select %214, %211, %215 : vector<8x128xi1>, vector<8x128xf32>
    %c0_62 = arith.constant 0 : index
    %217 = arith.index_cast %c4_i32 : i32 to index
    %c0_63 = arith.constant 0 : index
    %c0_64 = arith.constant 0 : index
    %218 = vector.load %arg6[%c0_62, %217, %c0_63, %c0_64] : memref<1x8x8x128xf32, #tpu.memory_space<vmem>>, vector<1x1x8x128xf32>
    %219 = vector.shape_cast %218 : vector<1x1x8x128xf32> to vector<8x128xf32>
    %220 = vector.shape_cast %216 : vector<8x128xf32> to vector<1x1x8x128xf32>
    tpu.vector_store %arg6[%c0_62, %217, %c0_63, %c0_64], %220 {strides = array<i32>} : memref<1x8x8x128xf32, #tpu.memory_space<vmem>>, vector<1x1x8x128xf32>,
    %221 = arith.select %214, %211, %179 : vector<8x128xi1>, vector<8x128xf32>
    %c5_i32 = arith.constant 5 : i32
    %c0_65 = arith.constant 0 : index
    %222 = arith.index_cast %c5_i32 : i32 to index
    %c0_66 = arith.constant 0 : index
    %c0_67 = arith.constant 0 : index
    %223 = vector.load %arg2[%c0_65, %222, %c0_66, %c0_67] : memref<1x8x8x384xf32, #tpu.memory_space<vmem>>, vector<1x1x8x384xf32>
    %224 = vector.shape_cast %223 : vector<1x1x8x384xf32> to vector<8x384xf32>
    %225 = arith.truncf %221 : vector<8x128xf32> to vector<8x128xbf16>
    %cst_68 = arith.constant dense<0.000000e+00> : vector<8x384xf32>
    %226 = tpu.matmul %225, %4, %cst_68 {dimension_numbers = #tpu.dot_dimension_numbers<[1], [0], [0], [1], [0, 0, 1, 1], [], []>} : vector<8x128xbf16>, vector<128x384xbf16>, vector<8x384xf32> -> vector<8x384xf32>
    %227 = vector.extract_strided_slice %224 {offsets = [0, 0], sizes = [8, 128], strides = [1, 1]} : vector<8x384xf32> to vector<8x128xf32>
    %228 = vector.extract_strided_slice %226 {offsets = [0, 0], sizes = [8, 128], strides = [1, 1]} : vector<8x384xf32> to vector<8x128xf32>
    %229 = arith.addf %227, %228 : vector<8x128xf32>
    %230 = arith.negf %229 : vector<8x128xf32>
    %231 = math.exp %230 : vector<8x128xf32>
    %cst_69 = arith.constant 1.000000e+00 : f32
    %232 = vector.broadcast %cst_69 : f32 to vector<8x128xf32>
    %233 = arith.addf %232, %231 : vector<8x128xf32>
    %234 = arith.divf %232, %233 : vector<8x128xf32>
    %235 = vector.extract_strided_slice %224 {offsets = [0, 128], sizes = [8, 128], strides = [1, 1]} : vector<8x384xf32> to vector<8x128xf32>
    %236 = vector.extract_strided_slice %226 {offsets = [0, 128], sizes = [8, 128], strides = [1, 1]} : vector<8x384xf32> to vector<8x128xf32>
    %237 = arith.addf %235, %236 : vector<8x128xf32>
    %238 = arith.negf %237 : vector<8x128xf32>
    %239 = math.exp %238 : vector<8x128xf32>
    %cst_70 = arith.constant 1.000000e+00 : f32
    %240 = vector.broadcast %cst_70 : f32 to vector<8x128xf32>
    %241 = arith.addf %240, %239 : vector<8x128xf32>
    %242 = arith.divf %240, %241 : vector<8x128xf32>
    %243 = vector.extract_strided_slice %224 {offsets = [0, 256], sizes = [8, 128], strides = [1, 1]} : vector<8x384xf32> to vector<8x128xf32>
    %244 = vector.extract_strided_slice %226 {offsets = [0, 256], sizes = [8, 128], strides = [1, 1]} : vector<8x384xf32> to vector<8x128xf32>
    %245 = arith.addf %244, %8 : vector<8x128xf32>
    %246 = arith.mulf %234, %245 : vector<8x128xf32>
    %247 = arith.addf %243, %246 : vector<8x128xf32>
    %248 = math.tanh %247 : vector<8x128xf32>
    %cst_71 = arith.constant 1.000000e+00 : f32
    %249 = vector.broadcast %cst_71 : f32 to vector<8x128xf32>
    %250 = arith.subf %249, %242 : vector<8x128xf32>
    %251 = arith.mulf %250, %248 : vector<8x128xf32>
    %252 = arith.mulf %242, %221 : vector<8x128xf32>
    %253 = arith.addf %251, %252 : vector<8x128xf32>
    %254 = arith.addi %10, %c5_i32 : i32
    %255 = vector.broadcast %254 : i32 to vector<8x128xi32>
    %256 = arith.cmpi slt, %255, %9 : vector<8x128xi32>
    %cst_72 = arith.constant 0.000000e+00 : f32
    %257 = vector.broadcast %cst_72 : f32 to vector<8x128xf32>
    %258 = arith.select %256, %253, %257 : vector<8x128xi1>, vector<8x128xf32>
    %c0_73 = arith.constant 0 : index
    %259 = arith.index_cast %c5_i32 : i32 to index
    %c0_74 = arith.constant 0 : index
    %c0_75 = arith.constant 0 : index
    %260 = vector.load %arg6[%c0_73, %259, %c0_74, %c0_75] : memref<1x8x8x128xf32, #tpu.memory_space<vmem>>, vector<1x1x8x128xf32>
    %261 = vector.shape_cast %260 : vector<1x1x8x128xf32> to vector<8x128xf32>
    %262 = vector.shape_cast %258 : vector<8x128xf32> to vector<1x1x8x128xf32>
    tpu.vector_store %arg6[%c0_73, %259, %c0_74, %c0_75], %262 {strides = array<i32>} : memref<1x8x8x128xf32, #tpu.memory_space<vmem>>, vector<1x1x8x128xf32>,
    %263 = arith.select %256, %253, %221 : vector<8x128xi1>, vector<8x128xf32>
    %c6_i32 = arith.constant 6 : i32
    %c0_76 = arith.constant 0 : index
    %264 = arith.index_cast %c6_i32 : i32 to index
    %c0_77 = arith.constant 0 : index
    %c0_78 = arith.constant 0 : index
    %265 = vector.load %arg2[%c0_76, %264, %c0_77, %c0_78] : memref<1x8x8x384xf32, #tpu.memory_space<vmem>>, vector<1x1x8x384xf32>
    %266 = vector.shape_cast %265 : vector<1x1x8x384xf32> to vector<8x384xf32>
    %267 = arith.truncf %263 : vector<8x128xf32> to vector<8x128xbf16>
    %cst_79 = arith.constant dense<0.000000e+00> : vector<8x384xf32>
    %268 = tpu.matmul %267, %4, %cst_79 {dimension_numbers = #tpu.dot_dimension_numbers<[1], [0], [0], [1], [0, 0, 1, 1], [], []>} : vector<8x128xbf16>, vector<128x384xbf16>, vector<8x384xf32> -> vector<8x384xf32>
    %269 = vector.extract_strided_slice %266 {offsets = [0, 0], sizes = [8, 128], strides = [1, 1]} : vector<8x384xf32> to vector<8x128xf32>
    %270 = vector.extract_strided_slice %268 {offsets = [0, 0], sizes = [8, 128], strides = [1, 1]} : vector<8x384xf32> to vector<8x128xf32>
    %271 = arith.addf %269, %270 : vector<8x128xf32>
    %272 = arith.negf %271 : vector<8x128xf32>
    %273 = math.exp %272 : vector<8x128xf32>
    %cst_80 = arith.constant 1.000000e+00 : f32
    %274 = vector.broadcast %cst_80 : f32 to vector<8x128xf32>
    %275 = arith.addf %274, %273 : vector<8x128xf32>
    %276 = arith.divf %274, %275 : vector<8x128xf32>
    %277 = vector.extract_strided_slice %266 {offsets = [0, 128], sizes = [8, 128], strides = [1, 1]} : vector<8x384xf32> to vector<8x128xf32>
    %278 = vector.extract_strided_slice %268 {offsets = [0, 128], sizes = [8, 128], strides = [1, 1]} : vector<8x384xf32> to vector<8x128xf32>
    %279 = arith.addf %277, %278 : vector<8x128xf32>
    %280 = arith.negf %279 : vector<8x128xf32>
    %281 = math.exp %280 : vector<8x128xf32>
    %cst_81 = arith.constant 1.000000e+00 : f32
    %282 = vector.broadcast %cst_81 : f32 to vector<8x128xf32>
    %283 = arith.addf %282, %281 : vector<8x128xf32>
    %284 = arith.divf %282, %283 : vector<8x128xf32>
    %285 = vector.extract_strided_slice %266 {offsets = [0, 256], sizes = [8, 128], strides = [1, 1]} : vector<8x384xf32> to vector<8x128xf32>
    %286 = vector.extract_strided_slice %268 {offsets = [0, 256], sizes = [8, 128], strides = [1, 1]} : vector<8x384xf32> to vector<8x128xf32>
    %287 = arith.addf %286, %8 : vector<8x128xf32>
    %288 = arith.mulf %276, %287 : vector<8x128xf32>
    %289 = arith.addf %285, %288 : vector<8x128xf32>
    %290 = math.tanh %289 : vector<8x128xf32>
    %cst_82 = arith.constant 1.000000e+00 : f32
    %291 = vector.broadcast %cst_82 : f32 to vector<8x128xf32>
    %292 = arith.subf %291, %284 : vector<8x128xf32>
    %293 = arith.mulf %292, %290 : vector<8x128xf32>
    %294 = arith.mulf %284, %263 : vector<8x128xf32>
    %295 = arith.addf %293, %294 : vector<8x128xf32>
    %296 = arith.addi %10, %c6_i32 : i32
    %297 = vector.broadcast %296 : i32 to vector<8x128xi32>
    %298 = arith.cmpi slt, %297, %9 : vector<8x128xi32>
    %cst_83 = arith.constant 0.000000e+00 : f32
    %299 = vector.broadcast %cst_83 : f32 to vector<8x128xf32>
    %300 = arith.select %298, %295, %299 : vector<8x128xi1>, vector<8x128xf32>
    %c0_84 = arith.constant 0 : index
    %301 = arith.index_cast %c6_i32 : i32 to index
    %c0_85 = arith.constant 0 : index
    %c0_86 = arith.constant 0 : index
    %302 = vector.load %arg6[%c0_84, %301, %c0_85, %c0_86] : memref<1x8x8x128xf32, #tpu.memory_space<vmem>>, vector<1x1x8x128xf32>
    %303 = vector.shape_cast %302 : vector<1x1x8x128xf32> to vector<8x128xf32>
    %304 = vector.shape_cast %300 : vector<8x128xf32> to vector<1x1x8x128xf32>
    tpu.vector_store %arg6[%c0_84, %301, %c0_85, %c0_86], %304 {strides = array<i32>} : memref<1x8x8x128xf32, #tpu.memory_space<vmem>>, vector<1x1x8x128xf32>,
    %305 = arith.select %298, %295, %263 : vector<8x128xi1>, vector<8x128xf32>
    %c7_i32 = arith.constant 7 : i32
    %c0_87 = arith.constant 0 : index
    %306 = arith.index_cast %c7_i32 : i32 to index
    %c0_88 = arith.constant 0 : index
    %c0_89 = arith.constant 0 : index
    %307 = vector.load %arg2[%c0_87, %306, %c0_88, %c0_89] : memref<1x8x8x384xf32, #tpu.memory_space<vmem>>, vector<1x1x8x384xf32>
    %308 = vector.shape_cast %307 : vector<1x1x8x384xf32> to vector<8x384xf32>
    %309 = arith.truncf %305 : vector<8x128xf32> to vector<8x128xbf16>
    %cst_90 = arith.constant dense<0.000000e+00> : vector<8x384xf32>
    %310 = tpu.matmul %309, %4, %cst_90 {dimension_numbers = #tpu.dot_dimension_numbers<[1], [0], [0], [1], [0, 0, 1, 1], [], []>} : vector<8x128xbf16>, vector<128x384xbf16>, vector<8x384xf32> -> vector<8x384xf32>
    %311 = vector.extract_strided_slice %308 {offsets = [0, 0], sizes = [8, 128], strides = [1, 1]} : vector<8x384xf32> to vector<8x128xf32>
    %312 = vector.extract_strided_slice %310 {offsets = [0, 0], sizes = [8, 128], strides = [1, 1]} : vector<8x384xf32> to vector<8x128xf32>
    %313 = arith.addf %311, %312 : vector<8x128xf32>
    %314 = arith.negf %313 : vector<8x128xf32>
    %315 = math.exp %314 : vector<8x128xf32>
    %cst_91 = arith.constant 1.000000e+00 : f32
    %316 = vector.broadcast %cst_91 : f32 to vector<8x128xf32>
    %317 = arith.addf %316, %315 : vector<8x128xf32>
    %318 = arith.divf %316, %317 : vector<8x128xf32>
    %319 = vector.extract_strided_slice %308 {offsets = [0, 128], sizes = [8, 128], strides = [1, 1]} : vector<8x384xf32> to vector<8x128xf32>
    %320 = vector.extract_strided_slice %310 {offsets = [0, 128], sizes = [8, 128], strides = [1, 1]} : vector<8x384xf32> to vector<8x128xf32>
    %321 = arith.addf %319, %320 : vector<8x128xf32>
    %322 = arith.negf %321 : vector<8x128xf32>
    %323 = math.exp %322 : vector<8x128xf32>
    %cst_92 = arith.constant 1.000000e+00 : f32
    %324 = vector.broadcast %cst_92 : f32 to vector<8x128xf32>
    %325 = arith.addf %324, %323 : vector<8x128xf32>
    %326 = arith.divf %324, %325 : vector<8x128xf32>
    %327 = vector.extract_strided_slice %308 {offsets = [0, 256], sizes = [8, 128], strides = [1, 1]} : vector<8x384xf32> to vector<8x128xf32>
    %328 = vector.extract_strided_slice %310 {offsets = [0, 256], sizes = [8, 128], strides = [1, 1]} : vector<8x384xf32> to vector<8x128xf32>
    %329 = arith.addf %328, %8 : vector<8x128xf32>
    %330 = arith.mulf %318, %329 : vector<8x128xf32>
    %331 = arith.addf %327, %330 : vector<8x128xf32>
    %332 = math.tanh %331 : vector<8x128xf32>
    %cst_93 = arith.constant 1.000000e+00 : f32
    %333 = vector.broadcast %cst_93 : f32 to vector<8x128xf32>
    %334 = arith.subf %333, %326 : vector<8x128xf32>
    %335 = arith.mulf %334, %332 : vector<8x128xf32>
    %336 = arith.mulf %326, %305 : vector<8x128xf32>
    %337 = arith.addf %335, %336 : vector<8x128xf32>
    %338 = arith.addi %10, %c7_i32 : i32
    %339 = vector.broadcast %338 : i32 to vector<8x128xi32>
    %340 = arith.cmpi slt, %339, %9 : vector<8x128xi32>
    %cst_94 = arith.constant 0.000000e+00 : f32
    %341 = vector.broadcast %cst_94 : f32 to vector<8x128xf32>
    %342 = arith.select %340, %337, %341 : vector<8x128xi1>, vector<8x128xf32>
    %c0_95 = arith.constant 0 : index
    %343 = arith.index_cast %c7_i32 : i32 to index
    %c0_96 = arith.constant 0 : index
    %c0_97 = arith.constant 0 : index
    %344 = vector.load %arg6[%c0_95, %343, %c0_96, %c0_97] : memref<1x8x8x128xf32, #tpu.memory_space<vmem>>, vector<1x1x8x128xf32>
    %345 = vector.shape_cast %344 : vector<1x1x8x128xf32> to vector<8x128xf32>
    %346 = vector.shape_cast %342 : vector<8x128xf32> to vector<1x1x8x128xf32>
    tpu.vector_store %arg6[%c0_95, %343, %c0_96, %c0_97], %346 {strides = array<i32>} : memref<1x8x8x128xf32, #tpu.memory_space<vmem>>, vector<1x1x8x128xf32>,
    %347 = arith.select %340, %337, %305 : vector<8x128xi1>, vector<8x128xf32>
    %c8_i32_98 = arith.constant 8 : i32
    %c0_99 = arith.constant 0 : index
    %c0_100 = arith.constant 0 : index
    %348 = vector.load %arg7[%c0_99, %c0_100] : memref<8x128xf32, #tpu.memory_space<vmem>>, vector<8x128xf32>
    tpu.vector_store %arg7[%c0_99, %c0_100], %347 {strides = array<i32>} : memref<8x128xf32, #tpu.memory_space<vmem>>, vector<8x128xf32>,
    return
  }
  func.func @transform_0(%arg0: i32, %arg1: i32) -> (i32, i32, i32, i32) {
    %c0_i32 = arith.constant 0 : i32
    %c0_i32_0 = arith.constant 0 : i32
    %c0_i32_1 = arith.constant 0 : i32
    return %arg0, %arg1, %c0_i32, %c0_i32_0 : i32, i32, i32, i32
  }
  func.func @transform_1(%arg0: i32, %arg1: i32) -> (i32, i32) {
    %c0_i32 = arith.constant 0 : i32
    %c0_i32_0 = arith.constant 0 : i32
    %c0_i32_1 = arith.constant 0 : i32
    return %c0_i32, %c0_i32_0 : i32, i32
  }
  func.func @transform_2(%arg0: i32, %arg1: i32) -> (i32, i32, i32) {
    %c0_i32 = arith.constant 0 : i32
    %c0_i32_0 = arith.constant 0 : i32
    %c0_i32_1 = arith.constant 0 : i32
    return %arg0, %c0_i32, %c0_i32_0 : i32, i32, i32
  }
  func.func @transform_3(%arg0: i32, %arg1: i32) -> (i32, i32, i32) {
    %c0_i32 = arith.constant 0 : i32
    %c0_i32_0 = arith.constant 0 : i32
    %c0_i32_1 = arith.constant 0 : i32
    return %arg0, %c0_i32, %c0_i32_0 : i32, i32, i32
  }
  func.func @transform_4(%arg0: i32, %arg1: i32) -> (i32, i32, i32, i32) {
    %c0_i32 = arith.constant 0 : i32
    %c0_i32_0 = arith.constant 0 : i32
    %c0_i32_1 = arith.constant 0 : i32
    return %arg0, %arg1, %c0_i32, %c0_i32_0 : i32, i32, i32, i32
  }
}

</mosaic_0001>

<llo_original>
// kernel: tpu_custom_call.1
$region0: #{tpu_custom_call.1}
  #allocation0 [shape = 'u32[]', space=smem, size = 0x4, offset = 0x4, fixed_abs, tag = 'smem constant byte address 0x4 - core index']
  #allocation1 [shape = 'u32[144,128]{1,0:T(1,128)}', space=vmem, size = 0x12000, scoped, tag = 'internal scratch']
  #allocation2 [shape = 'f32[8,128]{1,0:T(8,128)}', space=vmem, size = 0x1000, scoped, tag = 'scratch operand']
  %s0 = inlined_call_operand.hbm [shape: f32[2,8,8,384], index: 0, kind: input, shape index: {}]
  %s1 = inlined_call_operand.hbm [shape: s32[8,128], index: 1, kind: input, shape index: {}]
  %s2 = inlined_call_operand.hbm [shape: bf16[2,128,384], index: 2, kind: input, shape index: {}]
  %s3 = inlined_call_operand.vmem [shape: f32[2,1,128], index: 3, kind: input, shape index: {}]
  %s4 = inlined_call_operand.hbm [shape: f32[2,8,8,128], index: 4, kind: output, shape index: {}]
  %s5 = sld [smem:[#allocation0]]
  $region65: #{tpu_custom_call.1} parent=0
    _
  %s7 = ssub.s32 1, %s5
  %s8 = scalar_select 0, %s7, %s5
  $region1: #{tpu_custom_call.1} parent=0
    #allocation3 [shape = 'u8[196608]{0}', space=vmem, size = 0x30000, scoped, tag = 'input window, operand 0']
    #allocation4 [shape = 's32[2]{0}', space=sflag, size = 0x8, scoped, tag = 'scoped memory for tpu_custom_call.1']
    #allocation5 [shape = 's32[2]{0}', space=sflag, size = 0x8, scoped, tag = 'scoped memory for tpu_custom_call.1']
    #allocation6 [shape = 'u8[4096]{0}', space=vmem, size = 0x1000, scoped, tag = 'input window, operand 1, single buffered']
    #allocation7 [shape = 's32[1]{0}', space=sflag, size = 0x4, scoped, tag = 'scoped memory for tpu_custom_call.1']
    #allocation8 [shape = 'u8[196608]{0}', space=vmem, size = 0x30000, scoped, tag = 'input window, operand 2']
    #allocation9 [shape = 'u8[65536]{0}', space=vmem, size = 0x10000, scoped, tag = 'output window, operand 0']
    %9 = vsyncpa [#allocation4], 0
    %s10 = scalar_lea.sflag [#allocation4], 1
    %11 = vsyncpa %s10, 0
    %12 = vsyncpa [#allocation7], 0
    %13 = vsyncpa [#allocation5], 0
    %s14 = scalar_lea.sflag [#allocation5], 1
    %15 = vsyncpa %s14, 0
    loop: start=0, step=1, limit=4
    $region2: #{tpu_custom_call.1} parent=1 // loop_pre_header
      _
    $region3: #{tpu_custom_call.1} parent=1 // loop_header
      %s17 = sphi 0, %s21
      %p18 = scmp.ge.s32.totalorder %s17, 4
      %s24 = sphi 0, %s36
      %s25 = sphi 0, %s32
      %s26 = sphi 0, %s24
      %s27 = sphi 0, %s25
      %s28 = sphi 0, %s26
      %s29 = sphi 0, %s27
      %s41 = sphi 0, %s43
      %s44 = sphi 0, %s41
      %s45 = sphi 0, %s44
      %s61 = sphi 0, %s45
      %s65 = sphi 0, %s65
      %s67 = sphi 0, %s65
      %s68 = sphi 0, %s67
      %s82 = sphi 0, %s68
      %s88 = sphi 0, %s90
      %s91 = sphi 0, %s88
      %s92 = sphi 0, %s91
      %s108 = sphi 0, %s92
      %s114 = sphi 0, %s116
      %s117 = sphi 0, %s114
      %s118 = sphi 0, %s117
      %s134 = sphi 0, %s118
      %s142 = sphi 0, %s144
      %s145 = sphi 0, %s142
      %s146 = sphi 0, %s145
      %s162 = sphi 0, %s146
    $region4: #{tpu_custom_call.1} parent=1 // loop_header_branch
      %20 = sbr.rel (%p18) target = $region8
    $region5: #{tpu_custom_call.1} parent=1 // loop_body
      %s22 = ssub.s32 %s17, 1
      %s23 = ssub.s32 %s17, 2
      %s30 = sadd.s32 1, %s25
      %p31 = scmp.ge.s32.totalorder %s30, 1
      %s32 = scalar_select %p31, 0, %s30
      %s33 = sadd.s32 1, %s24
      %s34 = scalar_select %p31, %s33, %s24
      %p35 = scmp.ge.s32.totalorder %s34, 2
      %s36 = scalar_select %p35, 0, %s34
      %s37 = ssub.s32 %s24, %s36
      %s38 = ssub.s32 %s25, %s32
      %s39 = sor.u32 %s37, %s38
      %p40 = scmp.eq.s32.totalorder %s39, 0
      %s42 = sadd.s32 %s41, 1
      %s43 = scalar_select %p40, %s41, %s42
      %p46 = pneg %p40
      %p47 = scmp.eq.s32.totalorder %s17, 1
      %p48 = por %p46, %p47
      %p49 = scmp.ne.s32.totalorder %s41, %s44
      %p50 = scmp.eq.s32.totalorder %s17, 0
      %p51 = por %p49, %p50
      %p52 = scmp.ne.s32.totalorder %s41, %s44
      %p53 = scmp.eq.s32.totalorder %s22, 1
      %p54 = por %p52, %p53
      %p55 = scmp.ne.s32.totalorder %s44, %s45
      %p56 = scmp.eq.s32.totalorder %s22, 0
      %p57 = por %p55, %p56
      %p58 = scmp.ne.s32.totalorder %s44, %s45
      %p59 = scmp.eq.s32.totalorder %s23, 1
      %p60 = por %p58, %p59
      %p62 = scmp.ne.s32.totalorder %s45, %s61
      %p63 = scmp.eq.s32.totalorder %s23, 0
      %p64 = por %p62, %p63
      %s66 = sadd.s32 %s65, 1
      %p69 = scmp.eq.s32.totalorder %s17, 1
      %p70 = scmp.ne.s32.totalorder %s65, %s67
      %p71 = scmp.eq.s32.totalorder %s17, 0
      %p72 = por %p70, %p71
      %p73 = scmp.ne.s32.totalorder %s65, %s67
      %p74 = scmp.eq.s32.totalorder %s22, 1
      %p75 = por %p73, %p74
      %p76 = scmp.ne.s32.totalorder %s67, %s68
      %p77 = scmp.eq.s32.totalorder %s22, 0
      %p78 = por %p76, %p77
      %p79 = scmp.ne.s32.totalorder %s67, %s68
      %p80 = scmp.eq.s32.totalorder %s23, 1
      %p81 = por %p79, %p80
      %p83 = scmp.ne.s32.totalorder %s68, %s82
      %p84 = scmp.eq.s32.totalorder %s23, 0
      %p85 = por %p83, %p84
      %s86 = ssub.s32 %s24, %s36
      %p87 = scmp.eq.s32.totalorder %s86, 0
      %s89 = sadd.s32 %s88, 1
      %s90 = scalar_select %p87, %s88, %s89
      %p93 = pneg %p87
      %p94 = scmp.eq.s32.totalorder %s17, 1
      %p95 = por %p93, %p94
      %p96 = scmp.ne.s32.totalorder %s88, %s91
      %p97 = scmp.eq.s32.totalorder %s17, 0
      %p98 = por %p96, %p97
      %p99 = scmp.ne.s32.totalorder %s88, %s91
      %p100 = scmp.eq.s32.totalorder %s22, 1
      %p101 = por %p99, %p100
      %p102 = scmp.ne.s32.totalorder %s91, %s92
      %p103 = scmp.eq.s32.totalorder %s22, 0
      %p104 = por %p102, %p103
      %p105 = scmp.ne.s32.totalorder %s91, %s92
      %p106 = scmp.eq.s32.totalorder %s23, 1
      %p107 = por %p105, %p106
      %p109 = scmp.ne.s32.totalorder %s92, %s108
      %p110 = scmp.eq.s32.totalorder %s23, 0
      %p111 = por %p109, %p110
      %s112 = ssub.s32 %s24, %s36
      %p113 = scmp.eq.s32.totalorder %s112, 0
      %s115 = sadd.s32 %s114, 1
      %s116 = scalar_select %p113, %s114, %s115
      %p119 = pneg %p113
      %p120 = scmp.eq.s32.totalorder %s17, 1
      %p121 = por %p119, %p120
      %p122 = scmp.ne.s32.totalorder %s114, %s117
      %p123 = scmp.eq.s32.totalorder %s17, 0
      %p124 = por %p122, %p123
      %p125 = scmp.ne.s32.totalorder %s114, %s117
      %p126 = scmp.eq.s32.totalorder %s22, 1
      %p127 = por %p125, %p126
      %p128 = scmp.ne.s32.totalorder %s117, %s118
      %p129 = scmp.eq.s32.totalorder %s22, 0
      %p130 = por %p128, %p129
      %p131 = scmp.ne.s32.totalorder %s117, %s118
      %p132 = scmp.eq.s32.totalorder %s23, 1
      %p133 = por %p131, %p132
      %p135 = scmp.ne.s32.totalorder %s118, %s134
      %p136 = scmp.eq.s32.totalorder %s23, 0
      %p137 = por %p135, %p136
      %s138 = ssub.s32 %s24, %s36
      %s139 = ssub.s32 %s25, %s32
      %s140 = sor.u32 %s138, %s139
      %p141 = scmp.eq.s32.totalorder %s140, 0
      %s143 = sadd.s32 %s142, 1
      %s144 = scalar_select %p141, %s142, %s143
      %p147 = pneg %p141
      %p148 = scmp.eq.s32.totalorder %s17, 1
      %p149 = por %p147, %p148
      %p150 = scmp.ne.s32.totalorder %s142, %s145
      %p151 = scmp.eq.s32.totalorder %s17, 0
      %p152 = por %p150, %p151
      %p153 = scmp.ne.s32.totalorder %s142, %s145
      %p154 = scmp.eq.s32.totalorder %s22, 1
      %p155 = por %p153, %p154
      %p156 = scmp.ne.s32.totalorder %s145, %s146
      %p157 = scmp.eq.s32.totalorder %s22, 0
      %p158 = por %p156, %p157
      %p159 = scmp.ne.s32.totalorder %s145, %s146
      %p160 = scmp.eq.s32.totalorder %s23, 1
      %p161 = por %p159, %p160
      %p163 = scmp.ne.s32.totalorder %s146, %s162
      %p164 = scmp.eq.s32.totalorder %s23, 0
      %p165 = por %p163, %p164
      %p166 = scmp.le.s32.totalorder 1, %s17
      %p167 = scmp.lt.s32.totalorder %s17, 3
      %p168 = pnand %p166, %p167
      %p169 = pneg %p168
      // Predicated region
      $region9: #{tpu_custom_call.1} parent=5 // pred_check
        _
      $region10: #{tpu_custom_call.1} parent=5 // pred_check_branch
        %171 = sbr.rel (%p168) target = $region12
      $region11: #{tpu_custom_call.1} parent=5 // pred_region
        %s172 = ssub.s32 %s17, 1
        // Predicated region
        $region13: #{tpu_custom_call.1} parent=11 // pred_check
          %p173 = pneg %p78
        $region14: #{tpu_custom_call.1} parent=11 // pred_check_branch
          %175 = sbr.rel (%p173) target = $region16
        $region15: #{tpu_custom_call.1} parent=11 // pred_region
          %s177 = ssub.s32 128, 128
          %178 = vsyncadd [#allocation7], %s177
          %s180 = sshll.u32 [#allocation6], 4
          %s181 = int_to_ptr.vmem [resolvable:$true] %s180
          %183 = dma.hbm_to_vmem [thread:$0]  %s1, 128, %s181, [#allocation7]
        $region16: #{tpu_custom_call.1} parent=11 // pred_fallthru
          _
      $region12: #{tpu_custom_call.1} parent=5 // pred_fallthru
        _
      %p184 = scmp.lt.s32.totalorder %s17, 2
      // Predicated region
      $region17: #{tpu_custom_call.1} parent=5 // pred_check
        %p185 = pneg %p184
      $region18: #{tpu_custom_call.1} parent=5 // pred_check_branch
        %187 = sbr.rel (%p185) target = $region20
      $region19: #{tpu_custom_call.1} parent=5 // pred_region
        // Predicated region
        $region21: #{tpu_custom_call.1} parent=19 // pred_check
          %p188 = pneg %p51
        $region22: #{tpu_custom_call.1} parent=19 // pred_check_branch
          %190 = sbr.rel (%p188) target = $region24
        $region23: #{tpu_custom_call.1} parent=19 // pred_region
          %s191 = sand.u32 %s17, 1
          %s192 = scalar_lea.sflag [#allocation4], %s191
          %s193 = sand.u32 %s41, 1
          %s194 = smul.addr %s193, 192
          %s195 = scalar_lea.vmem [#allocation3], %s194
          %s196 = smul.u32 8, %s25
          %s198 = ssub.s32 3072, 3072
          %199 = vsyncadd %s192, %s198
          %s200 = smul.addr %s196, 3
          %s201 = smul.addr %s24, 24
          %s202 = sadd.s32 %s200, %s201
          %s203 = smul.addr %s202, 128
          %s204 = scalar_lea.hbm %s0, %s203
          %s205 = sshll.u32 %s195, 4
          %s206 = int_to_ptr.vmem [resolvable:$true] %s205
          %211 = dma.hbm_to_vmem [thread:$0]  %s204, 3072, %s206, %s192, 384, 384, 24
        $region24: #{tpu_custom_call.1} parent=19 // pred_fallthru
          _
        // Predicated region
        $region25: #{tpu_custom_call.1} parent=19 // pred_check
          %p212 = pneg %p98
        $region26: #{tpu_custom_call.1} parent=19 // pred_check_branch
          %214 = sbr.rel (%p212) target = $region28
        $region27: #{tpu_custom_call.1} parent=19 // pred_region
          %s215 = sand.u32 %s17, 1
          %s216 = scalar_lea.sflag [#allocation4], %s215
          %s217 = sand.u32 %s88, 1
          %s218 = smul.addr %s217, 192
          %s219 = scalar_lea.vmem [#allocation8], %s218
          %s221 = ssub.s32 3072, 3072
          %222 = vsyncadd %s216, %s221
          %s223 = smul.addr %s24, 48
          %s224 = smul.addr %s223, 64
          %s225 = scalar_lea.hbm %s2, %s224
          %s226 = sshll.u32 %s219, 4
          %s227 = int_to_ptr.vmem [resolvable:$true] %s226
          %232 = dma.hbm_to_vmem [thread:$0]  %s225, 3072, %s227, %s216, 192, 192, 12
        $region28: #{tpu_custom_call.1} parent=19 // pred_fallthru
          _
        // Predicated region
        $region29: #{tpu_custom_call.1} parent=19 // pred_check
          %p233 = pneg %p124
        $region30: #{tpu_custom_call.1} parent=19 // pred_check_branch
          %235 = sbr.rel (%p233) target = $region32
        $region31: #{tpu_custom_call.1} parent=19 // pred_region
          %p236 = scmp.lt.s32.totalorder %s24, 1
          %s237 = scalar_select %p236, %s24, 1
          %s238 = scalar_lea.vmem %s3, %s237
        $region32: #{tpu_custom_call.1} parent=19 // pred_fallthru
          _
      $region20: #{tpu_custom_call.1} parent=5 // pred_fallthru
        _
      %p239 = scmp.le.s32.totalorder 1, %s17
      %p240 = scmp.lt.s32.totalorder %s17, 3
      %p241 = pnand %p239, %p240
      %p242 = pneg %p241
      // Predicated region
      $region33: #{tpu_custom_call.1} parent=5 // pred_check
        _
      $region34: #{tpu_custom_call.1} parent=5 // pred_check_branch
        %244 = sbr.rel (%p241) target = $region36
      $region35: #{tpu_custom_call.1} parent=5 // pred_region
        %s245 = ssub.s32 %s17, 1
        %s246 = sand.u32 %s22, 1
        %s247 = scalar_lea.sflag [#allocation4], %s246
        %s248 = sand.u32 %s44, 1
        %s249 = smul.addr %s248, 192
        %s250 = scalar_lea.vmem [#allocation3], %s249
        // Predicated region
        $region37: #{tpu_custom_call.1} parent=35 // pred_check
          %p251 = pneg %p57
        $region38: #{tpu_custom_call.1} parent=35 // pred_check_branch
          %253 = sbr.rel (%p251) target = $region40
        $region39: #{tpu_custom_call.1} parent=35 // pred_region
          %254 = dma.done %s247, 3072
        $region40: #{tpu_custom_call.1} parent=35 // pred_fallthru
          _
        // Predicated region
        $region41: #{tpu_custom_call.1} parent=35 // pred_check
          %p255 = pneg %p78
        $region42: #{tpu_custom_call.1} parent=35 // pred_check_branch
          %257 = sbr.rel (%p255) target = $region44
        $region43: #{tpu_custom_call.1} parent=35 // pred_region
          %258 = dma.done [#allocation7], 128
        $region44: #{tpu_custom_call.1} parent=35 // pred_fallthru
          _
        %s259 = sand.u32 %s22, 1
        %s260 = scalar_lea.sflag [#allocation4], %s259
        %s261 = sand.u32 %s91, 1
        %s262 = smul.addr %s261, 192
        %s263 = scalar_lea.vmem [#allocation8], %s262
        // Predicated region
        $region45: #{tpu_custom_call.1} parent=35 // pred_check
          %p264 = pneg %p104
        $region46: #{tpu_custom_call.1} parent=35 // pred_check_branch
          %266 = sbr.rel (%p264) target = $region48
        $region47: #{tpu_custom_call.1} parent=35 // pred_region
          %267 = dma.done %s260, 3072
        $region48: #{tpu_custom_call.1} parent=35 // pred_fallthru
          _
        %s268 = sand.u32 %s22, 1
        %s269 = scalar_lea.sflag [#allocation4], %s268
        %s270 = sand.u32 %s44, 1
        %s271 = smul.addr %s270, 192
        %s272 = scalar_lea.vmem [#allocation3], %s271
        %p273 = pneg %p57
        %p274 = pneg %p54
        %p275 = pneg %p78
        %p276 = pneg %p75
        %s277 = sand.u32 %s22, 1
        %s278 = scalar_lea.sflag [#allocation4], %s277
        %s279 = sand.u32 %s91, 1
        %s280 = smul.addr %s279, 192
        %s281 = scalar_lea.vmem [#allocation8], %s280
        %p282 = pneg %p104
        %p283 = pneg %p101
        %p284 = scmp.lt.s32.totalorder %s26, 1
        %s285 = scalar_select %p284, %s26, 1
        %s286 = scalar_lea.vmem %s3, %s285
        %p287 = pneg %p130
        %p288 = pneg %p127
        %p289 = pneg %p158
        %p290 = pneg %p155
        %s291 = sand.u32 %s145, 1
        %s292 = scalar_lea.sflag [#allocation5], %s291
        %s293 = sand.u32 %s145, 1
        %s294 = smul.addr %s293, 64
        %s295 = scalar_lea.vmem [#allocation9], %s294
        %s296 = smul.u32 8, %s27
        %p297 = scmp.lt.s32.totalorder %s26, 1
        %s298 = scalar_select %p297, %s26, 1
        %s299 = scalar_lea.vmem %s3, %s298
        %s300 = smul.u32 8, %s27
        %p302 = scmp.eq.s32.totalorder %s27, 0
        // Predicated region
        $region49: #{tpu_custom_call.1} parent=35 // pred_check
          %p303 = pneg %p302
        $region50: #{tpu_custom_call.1} parent=35 // pred_check_branch
          %305 = sbr.rel (%p303) target = $region52
        $region51: #{tpu_custom_call.1} parent=35 // pred_region
          %306 = vst [vmem:[#allocation2] sm:$0xff] 0.0
        $region52: #{tpu_custom_call.1} parent=35 // pred_fallthru
          _
        %v307 = vld [vmem:[%s263] sm:$0xff]
        %v308 = vld [vmem:[%s263 + $0x8] sm:$0xf]
        %v309 = vld [vmem:[%s263 + $0xc] sm:$0xff]
        %v310 = vld [vmem:[%s263 + $0x14] sm:$0xf]
        %v311 = vld [vmem:[%s263 + $0x18] sm:$0xff]
        %v312 = vld [vmem:[%s263 + $0x20] sm:$0xf]
        %v313 = vld [vmem:[%s263 + $0x24] sm:$0xff]
        %v314 = vld [vmem:[%s263 + $0x2c] sm:$0xf]
        %v315 = vld [vmem:[%s263 + $0x30] sm:$0xff]
        %v316 = vld [vmem:[%s263 + $0x38] sm:$0xf]
        %v317 = vld [vmem:[%s263 + $0x3c] sm:$0xff]
        %v318 = vld [vmem:[%s263 + $0x44] sm:$0xf]
        %v319 = vld [vmem:[%s263 + $0x48] sm:$0xff]
        %v320 = vld [vmem:[%s263 + $0x50] sm:$0xf]
        %v321 = vld [vmem:[%s263 + $0x54] sm:$0xff]
        %v322 = vld [vmem:[%s263 + $0x5c] sm:$0xf]
        %v323 = vld [vmem:[%s263 + $0x60] sm:$0xff]
        %v324 = vld [vmem:[%s263 + $0x68] sm:$0xf]
        %v325 = vld [vmem:[%s263 + $0x6c] sm:$0xff]
        %v326 = vld [vmem:[%s263 + $0x74] sm:$0xf]
        %v327 = vld [vmem:[%s263 + $0x78] sm:$0xff]
        %v328 = vld [vmem:[%s263 + $0x80] sm:$0xf]
        %v329 = vld [vmem:[%s263 + $0x84] sm:$0xff]
        %v330 = vld [vmem:[%s263 + $0x8c] sm:$0xf]
        %v331 = vld [vmem:[%s263 + $0x90] sm:$0xff]
        %v332 = vld [vmem:[%s263 + $0x98] sm:$0xf]
        %v333 = vld [vmem:[%s263 + $0x9c] sm:$0xff]
        %v334 = vld [vmem:[%s263 + $0xa4] sm:$0xf]
        %v335 = vld [vmem:[%s263 + $0xa8] sm:$0xff]
        %v336 = vld [vmem:[%s263 + $0xb0] sm:$0xf]
        %v337 = vld [vmem:[%s263 + $0xb4] sm:$0xff]
        %v338 = vld [vmem:[%s263 + $0xbc] sm:$0xf]
        %v339 = vld [vmem:[%s299] sm:$0x1]
        %v341 = vlaneseq
        %v342 = vshrl.u32 %v341, 7
        %v343 = vsub.s32 0, %v342
        %v344 = vrot.slane %v339, %v343
        %v346 = vld [vmem:[#allocation6] sm:$0xff]
        %s347 = smul.u32 %s27, 8
        %v348 = vld [vmem:[#allocation2] sm:$0xff]
        %v349 = vld [vmem:[%s250] sm:$0xff]
        %v350 = vld [vmem:[%s250 + $0x8] sm:$0xff]
        %v351 = vld [vmem:[%s250 + $0x10] sm:$0xff]
        %v352 = vpack.c.bf16 %v348, %v348
        %v385 = vunpack.c.l.b16 %v307
        %v386 = vunpack.c.h.b16 %v307
        %v387 = vunpack.c.l.b16 %v308
        %v388 = vunpack.c.l.b16 %v309
        %v389 = vunpack.c.h.b16 %v309
        %v390 = vunpack.c.l.b16 %v310
        %v391 = vunpack.c.l.b16 %v311
        %v392 = vunpack.c.h.b16 %v311
        %v393 = vunpack.c.l.b16 %v312
        %v394 = vunpack.c.l.b16 %v313
        %v395 = vunpack.c.h.b16 %v313
        %v396 = vunpack.c.l.b16 %v314
        %v397 = vunpack.c.l.b16 %v315
        %v398 = vunpack.c.h.b16 %v315
        %v399 = vunpack.c.l.b16 %v316
        %v400 = vunpack.c.l.b16 %v317
        %v401 = vunpack.c.h.b16 %v317
        %v402 = vunpack.c.l.b16 %v318
        %v403 = vunpack.c.l.b16 %v319
        %v404 = vunpack.c.h.b16 %v319
        %v405 = vunpack.c.l.b16 %v320
        %v406 = vunpack.c.l.b16 %v321
        %v407 = vunpack.c.h.b16 %v321
        %v408 = vunpack.c.l.b16 %v322
        %v409 = vunpack.c.l.b16 %v323
        %v410 = vunpack.c.h.b16 %v323
        %v411 = vunpack.c.l.b16 %v324
        %v412 = vunpack.c.l.b16 %v325
        %v413 = vunpack.c.h.b16 %v325
        %v414 = vunpack.c.l.b16 %v326
        %v415 = vunpack.c.l.b16 %v327
        %v416 = vunpack.c.h.b16 %v327
        %v417 = vunpack.c.l.b16 %v328
        %v418 = vunpack.c.l.b16 %v329
        %v419 = vunpack.c.h.b16 %v329
        %v420 = vunpack.c.l.b16 %v330
        %v421 = vunpack.c.l.b16 %v331
        %v422 = vunpack.c.h.b16 %v331
        %v423 = vunpack.c.l.b16 %v332
        %v424 = vunpack.c.l.b16 %v333
        %v425 = vunpack.c.h.b16 %v333
        %v426 = vunpack.c.l.b16 %v334
        %v427 = vunpack.c.l.b16 %v335
        %v428 = vunpack.c.h.b16 %v335
        %v429 = vunpack.c.l.b16 %v336
        %v430 = vunpack.c.l.b16 %v337
        %v431 = vunpack.c.h.b16 %v337
        %v432 = vunpack.c.l.b16 %v338
        %v433 = vpack.c.b16 %v388, %v385
        %v434 = vpack.c.b16 %v389, %v386
        %v435 = vpack.c.b16 %v390, %v387
        %v436 = vpack.c.b16 %v394, %v391
        %v437 = vpack.c.b16 %v395, %v392
        %v438 = vpack.c.b16 %v396, %v393
        %v439 = vpack.c.b16 %v400, %v397
        %v440 = vpack.c.b16 %v401, %v398
        %v441 = vpack.c.b16 %v402, %v399
        %v442 = vpack.c.b16 %v406, %v403
        %v443 = vpack.c.b16 %v407, %v404
        %v444 = vpack.c.b16 %v408, %v405
        %v445 = vpack.c.b16 %v412, %v409
        %v446 = vpack.c.b16 %v413, %v410
        %v447 = vpack.c.b16 %v414, %v411
        %v448 = vpack.c.b16 %v418, %v415
        %v449 = vpack.c.b16 %v419, %v416
        %v450 = vpack.c.b16 %v420, %v417
        %v451 = vpack.c.b16 %v424, %v421
        %v452 = vpack.c.b16 %v425, %v422
        %v453 = vpack.c.b16 %v426, %v423
        %v454 = vpack.c.b16 %v430, %v427
        %v455 = vpack.c.b16 %v431, %v428
        %v456 = vpack.c.b16 %v432, %v429
        %481 = vmatprep.subr.bf16.mxu0 %v434
        %482 = vmatpush1.bf16.msra.mxu0 %v433
        %483 = vmatprep.subr.bf16.mxu0 %v437
        %484 = vmatpush1.bf16.msra.mxu0 %v436
        %485 = vmatprep.subr.bf16.mxu0 %v440
        %486 = vmatpush1.bf16.msra.mxu0 %v439
        %487 = vmatprep.subr.bf16.mxu0 %v443
        %488 = vmatpush1.bf16.msra.mxu0 %v442
        %489 = vmatprep.subr.bf16.mxu0 %v446
        %490 = vmatpush1.bf16.msra.mxu0 %v445
        %491 = vmatprep.subr.bf16.mxu0 %v449
        %492 = vmatpush1.bf16.msra.mxu0 %v448
        %493 = vmatprep.subr.bf16.mxu0 %v452
        %494 = vmatpush1.bf16.msra.mxu0 %v451
        %495 = vmatprep.subr.bf16.mxu0 %v455
        %496 = vmatpush1.bf16.msra.mxu0 %v454
        %497 = vmatprep.subr.bf16.mxu0 0
        %498 = vmatpush1.bf16.msra.mxu0 0
        %499 = vmatprep.subr.bf16.mxu0 0
        %500 = vmatpush1.bf16.msra.mxu0 0
        %501 = vmatprep.subr.bf16.mxu0 0
        %502 = vmatpush1.bf16.msra.mxu0 0
        %503 = vmatprep.subr.bf16.mxu0 0
        %504 = vmatpush1.bf16.msra.mxu0 0
        %505 = vmatprep.subr.bf16.mxu0 0
        %506 = vmatpush1.bf16.msra.mxu0 0
        %507 = vmatprep.subr.bf16.mxu0 0
        %508 = vmatpush1.bf16.msra.mxu0 0
        %509 = vmatprep.subr.bf16.mxu0 0
        %510 = vmatpush1.bf16.msra.mxu0 0
        %511 = vmatprep.subr.bf16.mxu0 0
        %512 = vmatpush1.bf16.msra.mxu0 0
        %513 = vmatprep.mubr.bf16.mxu0 0
        %514 = vmatmul.mubr.bf16.gmra.mrb[0].mxu0 %v352
        %v515 = vpop.f32.mrb[0].mxu0
        %v516 = vadd.f32 0.0, %v515
        %v517 = vpop.f32.mrb[0].mxu0
        %v518 = vadd.f32 0.0, %v517
        %v519 = vpop.f32.mrb[0].mxu0
        %v520 = vpop.f32.mrb[0].mxu0
        %521 = vdwg.mxu0
        %522 = vmatprep.subr.bf16.mxu0 0
        %523 = vmatpush1.bf16.msra.mxu0 %v435
        %524 = vmatprep.subr.bf16.mxu0 0
        %525 = vmatpush1.bf16.msra.mxu0 %v438
        %526 = vmatprep.subr.bf16.mxu0 0
        %527 = vmatpush1.bf16.msra.mxu0 %v441
        %528 = vmatprep.subr.bf16.mxu0 0
        %529 = vmatpush1.bf16.msra.mxu0 %v444
        %530 = vmatprep.subr.bf16.mxu0 0
        %531 = vmatpush1.bf16.msra.mxu0 %v447
        %532 = vmatprep.subr.bf16.mxu0 0
        %533 = vmatpush1.bf16.msra.mxu0 %v450
        %534 = vmatprep.subr.bf16.mxu0 0
        %535 = vmatpush1.bf16.msra.mxu0 %v453
        %536 = vmatprep.subr.bf16.mxu0 0
        %537 = vmatpush1.bf16.msra.mxu0 %v456
        %538 = vmatprep.subr.bf16.mxu0 0
        %539 = vmatpush1.bf16.msra.mxu0 0
        %540 = vmatprep.subr.bf16.mxu0 0
        %541 = vmatpush1.bf16.msra.mxu0 0
        %542 = vmatprep.subr.bf16.mxu0 0
        %543 = vmatpush1.bf16.msra.mxu0 0
        %544 = vmatprep.subr.bf16.mxu0 0
        %545 = vmatpush1.bf16.msra.mxu0 0
        %546 = vmatprep.subr.bf16.mxu0 0
        %547 = vmatpush1.bf16.msra.mxu0 0
        %548 = vmatprep.subr.bf16.mxu0 0
        %549 = vmatpush1.bf16.msra.mxu0 0
        %550 = vmatprep.subr.bf16.mxu0 0
        %551 = vmatpush1.bf16.msra.mxu0 0
        %552 = vmatprep.subr.bf16.mxu0 0
        %553 = vmatpush1.bf16.msra.mxu0 0
        %554 = vmatprep.mubr.bf16.mxu0 0
        %555 = vmatmul.mubr.bf16.gmra.mrb[0].mxu0 %v352
        %v556 = vpop.f32.mrb[0].mxu0
        %v557 = vadd.f32 0.0, %v556
        %v558 = vpop.f32.mrb[0].mxu0
        %v559 = vpop.f32.mrb[0].mxu0
        %v560 = vpop.f32.mrb[0].mxu0
        %561 = vdwg.mxu0
        %v562 = vadd.f32 %v349, %v516
        %v563 = vxor.u32 %v562, 2147483648
        %v564 = vmul.f32 %v563, 1.442695
        %v565 = vpow.pop %v564
        %v566 = vadd.f32 %v565, 1.0
        %v567 = vrcp.pop %v566
        %v568 = vmul.f32 1.0, %v567
        %v569 = vadd.f32 %v350, %v518
        %v570 = vxor.u32 %v569, 2147483648
        %v571 = vmul.f32 %v570, 1.442695
        %v572 = vpow.pop %v571
        %v573 = vadd.f32 %v572, 1.0
        %v574 = vrcp.pop %v573
        %v575 = vmul.f32 1.0, %v574
        %v576 = vadd.f32 %v557, %v344
        %v577 = vmul.f32 %v568, %v576
        %v578 = vadd.f32 %v351, %v577
        %v579 = vtanh.pop %v578
        %v580 = vsub.f32 1.0, %v575
        %v581 = vmul.f32 %v580, %v579
        %v582 = vmul.f32 %v575, %v348
        %v583 = vadd.f32 %v581, %v582
        %v584 = vstv %s347
        %vm585 = vcmp.lt.s32.totalorder %v584, %v346
        %v586 = vsel %vm585, %v583, 0.0
        %587 = vst [vmem:[%s295] sm:$0xff] %v586
        %v588 = vsel %vm585, %v583, %v348
        %s589 = scalar_lea.vmem %s250, 24 [#allocation3]
        %v590 = vld [vmem:[%s589] sm:$0xff]
        %v591 = vld [vmem:[%s589 + $0x8] sm:$0xff]
        %v592 = vld [vmem:[%s589 + $0x10] sm:$0xff]
        %v593 = vpack.c.bf16 %v588, %v588
        %594 = vmatprep.subr.bf16.mxu0 %v434
        %595 = vmatpush1.bf16.msra.mxu0 %v433
        %596 = vmatprep.subr.bf16.mxu0 %v437
        %597 = vmatpush1.bf16.msra.mxu0 %v436
        %598 = vmatprep.subr.bf16.mxu0 %v440
        %599 = vmatpush1.bf16.msra.mxu0 %v439
        %600 = vmatprep.subr.bf16.mxu0 %v443
        %601 = vmatpush1.bf16.msra.mxu0 %v442
        %602 = vmatprep.subr.bf16.mxu0 %v446
        %603 = vmatpush1.bf16.msra.mxu0 %v445
        %604 = vmatprep.subr.bf16.mxu0 %v449
        %605 = vmatpush1.bf16.msra.mxu0 %v448
        %606 = vmatprep.subr.bf16.mxu0 %v452
        %607 = vmatpush1.bf16.msra.mxu0 %v451
        %608 = vmatprep.subr.bf16.mxu0 %v455
        %609 = vmatpush1.bf16.msra.mxu0 %v454
        %610 = vmatprep.subr.bf16.mxu0 0
        %611 = vmatpush1.bf16.msra.mxu0 0
        %612 = vmatprep.subr.bf16.mxu0 0
        %613 = vmatpush1.bf16.msra.mxu0 0
        %614 = vmatprep.subr.bf16.mxu0 0
        %615 = vmatpush1.bf16.msra.mxu0 0
        %616 = vmatprep.subr.bf16.mxu0 0
        %617 = vmatpush1.bf16.msra.mxu0 0
        %618 = vmatprep.subr.bf16.mxu0 0
        %619 = vmatpush1.bf16.msra.mxu0 0
        %620 = vmatprep.subr.bf16.mxu0 0
        %621 = vmatpush1.bf16.msra.mxu0 0
        %622 = vmatprep.subr.bf16.mxu0 0
        %623 = vmatpush1.bf16.msra.mxu0 0
        %624 = vmatprep.subr.bf16.mxu0 0
        %625 = vmatpush1.bf16.msra.mxu0 0
        %626 = vmatprep.mubr.bf16.mxu0 0
        %627 = vmatmul.mubr.bf16.gmra.mrb[0].mxu0 %v593
        %v628 = vpop.f32.mrb[0].mxu0
        %v629 = vadd.f32 0.0, %v628
        %v630 = vpop.f32.mrb[0].mxu0
        %v631 = vadd.f32 0.0, %v630
        %v632 = vpop.f32.mrb[0].mxu0
        %v633 = vpop.f32.mrb[0].mxu0
        %634 = vdwg.mxu0
        %635 = vmatprep.subr.bf16.mxu0 0
        %636 = vmatpush1.bf16.msra.mxu0 %v435
        %637 = vmatprep.subr.bf16.mxu0 0
        %638 = vmatpush1.bf16.msra.mxu0 %v438
        %639 = vmatprep.subr.bf16.mxu0 0
        %640 = vmatpush1.bf16.msra.mxu0 %v441
        %641 = vmatprep.subr.bf16.mxu0 0
        %642 = vmatpush1.bf16.msra.mxu0 %v444
        %643 = vmatprep.subr.bf16.mxu0 0
        %644 = vmatpush1.bf16.msra.mxu0 %v447
        %645 = vmatprep.subr.bf16.mxu0 0
        %646 = vmatpush1.bf16.msra.mxu0 %v450
        %647 = vmatprep.subr.bf16.mxu0 0
        %648 = vmatpush1.bf16.msra.mxu0 %v453
        %649 = vmatprep.subr.bf16.mxu0 0
        %650 = vmatpush1.bf16.msra.mxu0 %v456
        %651 = vmatprep.subr.bf16.mxu0 0
        %652 = vmatpush1.bf16.msra.mxu0 0
        %653 = vmatprep.subr.bf16.mxu0 0
        %654 = vmatpush1.bf16.msra.mxu0 0
        %655 = vmatprep.subr.bf16.mxu0 0
        %656 = vmatpush1.bf16.msra.mxu0 0
        %657 = vmatprep.subr.bf16.mxu0 0
        %658 = vmatpush1.bf16.msra.mxu0 0
        %659 = vmatprep.subr.bf16.mxu0 0
        %660 = vmatpush1.bf16.msra.mxu0 0
        %661 = vmatprep.subr.bf16.mxu0 0
        %662 = vmatpush1.bf16.msra.mxu0 0
        %663 = vmatprep.subr.bf16.mxu0 0
        %664 = vmatpush1.bf16.msra.mxu0 0
        %665 = vmatprep.subr.bf16.mxu0 0
        %666 = vmatpush1.bf16.msra.mxu0 0
        %667 = vmatprep.mubr.bf16.mxu0 0
        %668 = vmatmul.mubr.bf16.gmra.mrb[0].mxu0 %v593
        %v669 = vpop.f32.mrb[0].mxu0
        %v670 = vadd.f32 0.0, %v669
        %v671 = vpop.f32.mrb[0].mxu0
        %v672 = vpop.f32.mrb[0].mxu0
        %v673 = vpop.f32.mrb[0].mxu0
        %674 = vdwg.mxu0
        %v675 = vadd.f32 %v590, %v629
        %v676 = vxor.u32 %v675, 2147483648
        %v677 = vmul.f32 %v676, 1.442695
        %v678 = vpow.pop %v677
        %v679 = vadd.f32 %v678, 1.0
        %v680 = vrcp.pop %v679
        %v681 = vmul.f32 1.0, %v680
        %v682 = vadd.f32 %v591, %v631
        %v683 = vxor.u32 %v682, 2147483648
        %v684 = vmul.f32 %v683, 1.442695
        %v685 = vpow.pop %v684
        %v686 = vadd.f32 %v685, 1.0
        %v687 = vrcp.pop %v686
        %v688 = vmul.f32 1.0, %v687
        %v689 = vadd.f32 %v670, %v344
        %v690 = vmul.f32 %v681, %v689
        %v691 = vadd.f32 %v592, %v690
        %v692 = vtanh.pop %v691
        %v693 = vsub.f32 1.0, %v688
        %v694 = vmul.f32 %v693, %v692
        %v695 = vmul.f32 %v688, %v588
        %v696 = vadd.f32 %v694, %v695
        %s697 = sadd.s32 %s347, 1
        %v698 = vstv %s697
        %vm699 = vcmp.lt.s32.totalorder %v698, %v346
        %v700 = vsel %vm699, %v696, 0.0
        %s701 = scalar_lea.vmem %s295, 8 [#allocation9]
        %702 = vst [vmem:[%s701] sm:$0xff] %v700
        %v703 = vsel %vm699, %v696, %v588
        %s704 = scalar_lea.vmem %s250, 48 [#allocation3]
        %v705 = vld [vmem:[%s704] sm:$0xff]
        %v706 = vld [vmem:[%s704 + $0x8] sm:$0xff]
        %v707 = vld [vmem:[%s704 + $0x10] sm:$0xff]
        %v708 = vpack.c.bf16 %v703, %v703
        %709 = vmatprep.subr.bf16.mxu0 %v434
        %710 = vmatpush1.bf16.msra.mxu0 %v433
        %711 = vmatprep.subr.bf16.mxu0 %v437
        %712 = vmatpush1.bf16.msra.mxu0 %v436
        %713 = vmatprep.subr.bf16.mxu0 %v440
        %714 = vmatpush1.bf16.msra.mxu0 %v439
        %715 = vmatprep.subr.bf16.mxu0 %v443
        %716 = vmatpush1.bf16.msra.mxu0 %v442
        %717 = vmatprep.subr.bf16.mxu0 %v446
        %718 = vmatpush1.bf16.msra.mxu0 %v445
        %719 = vmatprep.subr.bf16.mxu0 %v449
        %720 = vmatpush1.bf16.msra.mxu0 %v448
        %721 = vmatprep.subr.bf16.mxu0 %v452
        %722 = vmatpush1.bf16.msra.mxu0 %v451
        %723 = vmatprep.subr.bf16.mxu0 %v455
        %724 = vmatpush1.bf16.msra.mxu0 %v454
        %725 = vmatprep.subr.bf16.mxu0 0
        %726 = vmatpush1.bf16.msra.mxu0 0
        %727 = vmatprep.subr.bf16.mxu0 0
        %728 = vmatpush1.bf16.msra.mxu0 0
        %729 = vmatprep.subr.bf16.mxu0 0
        %730 = vmatpush1.bf16.msra.mxu0 0
        %731 = vmatprep.subr.bf16.mxu0 0
        %732 = vmatpush1.bf16.msra.mxu0 0
        %733 = vmatprep.subr.bf16.mxu0 0
        %734 = vmatpush1.bf16.msra.mxu0 0
        %735 = vmatprep.subr.bf16.mxu0 0
        %736 = vmatpush1.bf16.msra.mxu0 0
        %737 = vmatprep.subr.bf16.mxu0 0
        %738 = vmatpush1.bf16.msra.mxu0 0
        %739 = vmatprep.subr.bf16.mxu0 0
        %740 = vmatpush1.bf16.msra.mxu0 0
        %741 = vmatprep.mubr.bf16.mxu0 0
        %742 = vmatmul.mubr.bf16.gmra.mrb[0].mxu0 %v708
        %v743 = vpop.f32.mrb[0].mxu0
        %v744 = vadd.f32 0.0, %v743
        %v745 = vpop.f32.mrb[0].mxu0
        %v746 = vadd.f32 0.0, %v745
        %v747 = vpop.f32.mrb[0].mxu0
        %v748 = vpop.f32.mrb[0].mxu0
        %749 = vdwg.mxu0
        %750 = vmatprep.subr.bf16.mxu0 0
        %751 = vmatpush1.bf16.msra.mxu0 %v435
        %752 = vmatprep.subr.bf16.mxu0 0
        %753 = vmatpush1.bf16.msra.mxu0 %v438
        %754 = vmatprep.subr.bf16.mxu0 0
        %755 = vmatpush1.bf16.msra.mxu0 %v441
        %756 = vmatprep.subr.bf16.mxu0 0
        %757 = vmatpush1.bf16.msra.mxu0 %v444
        %758 = vmatprep.subr.bf16.mxu0 0
        %759 = vmatpush1.bf16.msra.mxu0 %v447
        %760 = vmatprep.subr.bf16.mxu0 0
        %761 = vmatpush1.bf16.msra.mxu0 %v450
        %762 = vmatprep.subr.bf16.mxu0 0
        %763 = vmatpush1.bf16.msra.mxu0 %v453
        %764 = vmatprep.subr.bf16.mxu0 0
        %765 = vmatpush1.bf16.msra.mxu0 %v456
        %766 = vmatprep.subr.bf16.mxu0 0
        %767 = vmatpush1.bf16.msra.mxu0 0
        %768 = vmatprep.subr.bf16.mxu0 0
        %769 = vmatpush1.bf16.msra.mxu0 0
        %770 = vmatprep.subr.bf16.mxu0 0
        %771 = vmatpush1.bf16.msra.mxu0 0
        %772 = vmatprep.subr.bf16.mxu0 0
        %773 = vmatpush1.bf16.msra.mxu0 0
        %774 = vmatprep.subr.bf16.mxu0 0
        %775 = vmatpush1.bf16.msra.mxu0 0
        %776 = vmatprep.subr.bf16.mxu0 0
        %777 = vmatpush1.bf16.msra.mxu0 0
        %778 = vmatprep.subr.bf16.mxu0 0
        %779 = vmatpush1.bf16.msra.mxu0 0
        %780 = vmatprep.subr.bf16.mxu0 0
        %781 = vmatpush1.bf16.msra.mxu0 0
        %782 = vmatprep.mubr.bf16.mxu0 0
        %783 = vmatmul.mubr.bf16.gmra.mrb[0].mxu0 %v708
        %v784 = vpop.f32.mrb[0].mxu0
        %v785 = vadd.f32 0.0, %v784
        %v786 = vpop.f32.mrb[0].mxu0
        %v787 = vpop.f32.mrb[0].mxu0
        %v788 = vpop.f32.mrb[0].mxu0
        %789 = vdwg.mxu0
        %v790 = vadd.f32 %v705, %v744
        %v791 = vxor.u32 %v790, 2147483648
        %v792 = vmul.f32 %v791, 1.442695
        %v793 = vpow.pop %v792
        %v794 = vadd.f32 %v793, 1.0
        %v795 = vrcp.pop %v794
        %v796 = vmul.f32 1.0, %v795
        %v797 = vadd.f32 %v706, %v746
        %v798 = vxor.u32 %v797, 2147483648
        %v799 = vmul.f32 %v798, 1.442695
        %v800 = vpow.pop %v799
        %v801 = vadd.f32 %v800, 1.0
        %v802 = vrcp.pop %v801
        %v803 = vmul.f32 1.0, %v802
        %v804 = vadd.f32 %v785, %v344
        %v805 = vmul.f32 %v796, %v804
        %v806 = vadd.f32 %v707, %v805
        %v807 = vtanh.pop %v806
        %v808 = vsub.f32 1.0, %v803
        %v809 = vmul.f32 %v808, %v807
        %v810 = vmul.f32 %v803, %v703
        %v811 = vadd.f32 %v809, %v810
        %s812 = sadd.s32 %s347, 2
        %v813 = vstv %s812
        %vm814 = vcmp.lt.s32.totalorder %v813, %v346
        %v815 = vsel %vm814, %v811, 0.0
        %s816 = scalar_lea.vmem %s295, 16 [#allocation9]
        %817 = vst [vmem:[%s816] sm:$0xff] %v815
        %v818 = vsel %vm814, %v811, %v703
        %s819 = scalar_lea.vmem %s250, 72 [#allocation3]
        %v820 = vld [vmem:[%s819] sm:$0xff]
        %v821 = vld [vmem:[%s819 + $0x8] sm:$0xff]
        %v822 = vld [vmem:[%s819 + $0x10] sm:$0xff]
        %v823 = vpack.c.bf16 %v818, %v818
        %824 = vmatprep.subr.bf16.mxu0 %v434
        %825 = vmatpush1.bf16.msra.mxu0 %v433
        %826 = vmatprep.subr.bf16.mxu0 %v437
        %827 = vmatpush1.bf16.msra.mxu0 %v436
        %828 = vmatprep.subr.bf16.mxu0 %v440
        %829 = vmatpush1.bf16.msra.mxu0 %v439
        %830 = vmatprep.subr.bf16.mxu0 %v443
        %831 = vmatpush1.bf16.msra.mxu0 %v442
        %832 = vmatprep.subr.bf16.mxu0 %v446
        %833 = vmatpush1.bf16.msra.mxu0 %v445
        %834 = vmatprep.subr.bf16.mxu0 %v449
        %835 = vmatpush1.bf16.msra.mxu0 %v448
        %836 = vmatprep.subr.bf16.mxu0 %v452
        %837 = vmatpush1.bf16.msra.mxu0 %v451
        %838 = vmatprep.subr.bf16.mxu0 %v455
        %839 = vmatpush1.bf16.msra.mxu0 %v454
        %840 = vmatprep.subr.bf16.mxu0 0
        %841 = vmatpush1.bf16.msra.mxu0 0
        %842 = vmatprep.subr.bf16.mxu0 0
        %843 = vmatpush1.bf16.msra.mxu0 0
        %844 = vmatprep.subr.bf16.mxu0 0
        %845 = vmatpush1.bf16.msra.mxu0 0
        %846 = vmatprep.subr.bf16.mxu0 0
        %847 = vmatpush1.bf16.msra.mxu0 0
        %848 = vmatprep.subr.bf16.mxu0 0
        %849 = vmatpush1.bf16.msra.mxu0 0
        %850 = vmatprep.subr.bf16.mxu0 0
        %851 = vmatpush1.bf16.msra.mxu0 0
        %852 = vmatprep.subr.bf16.mxu0 0
        %853 = vmatpush1.bf16.msra.mxu0 0
        %854 = vmatprep.subr.bf16.mxu0 0
        %855 = vmatpush1.bf16.msra.mxu0 0
        %856 = vmatprep.mubr.bf16.mxu0 0
        %857 = vmatmul.mubr.bf16.gmra.mrb[0].mxu0 %v823
        %v858 = vpop.f32.mrb[0].mxu0
        %v859 = vadd.f32 0.0, %v858
        %v860 = vpop.f32.mrb[0].mxu0
        %v861 = vadd.f32 0.0, %v860
        %v862 = vpop.f32.mrb[0].mxu0
        %v863 = vpop.f32.mrb[0].mxu0
        %864 = vdwg.mxu0
        %865 = vmatprep.subr.bf16.mxu0 0
        %866 = vmatpush1.bf16.msra.mxu0 %v435
        %867 = vmatprep.subr.bf16.mxu0 0
        %868 = vmatpush1.bf16.msra.mxu0 %v438
        %869 = vmatprep.subr.bf16.mxu0 0
        %870 = vmatpush1.bf16.msra.mxu0 %v441
        %871 = vmatprep.subr.bf16.mxu0 0
        %872 = vmatpush1.bf16.msra.mxu0 %v444
        %873 = vmatprep.subr.bf16.mxu0 0
        %874 = vmatpush1.bf16.msra.mxu0 %v447
        %875 = vmatprep.subr.bf16.mxu0 0
        %876 = vmatpush1.bf16.msra.mxu0 %v450
        %877 = vmatprep.subr.bf16.mxu0 0
        %878 = vmatpush1.bf16.msra.mxu0 %v453
        %879 = vmatprep.subr.bf16.mxu0 0
        %880 = vmatpush1.bf16.msra.mxu0 %v456
        %881 = vmatprep.subr.bf16.mxu0 0
        %882 = vmatpush1.bf16.msra.mxu0 0
        %883 = vmatprep.subr.bf16.mxu0 0
        %884 = vmatpush1.bf16.msra.mxu0 0
        %885 = vmatprep.subr.bf16.mxu0 0
        %886 = vmatpush1.bf16.msra.mxu0 0
        %887 = vmatprep.subr.bf16.mxu0 0
        %888 = vmatpush1.bf16.msra.mxu0 0
        %889 = vmatprep.subr.bf16.mxu0 0
        %890 = vmatpush1.bf16.msra.mxu0 0
        %891 = vmatprep.subr.bf16.mxu0 0
        %892 = vmatpush1.bf16.msra.mxu0 0
        %893 = vmatprep.subr.bf16.mxu0 0
        %894 = vmatpush1.bf16.msra.mxu0 0
        %895 = vmatprep.subr.bf16.mxu0 0
        %896 = vmatpush1.bf16.msra.mxu0 0
        %897 = vmatprep.mubr.bf16.mxu0 0
        %898 = vmatmul.mubr.bf16.gmra.mrb[0].mxu0 %v823
        %v899 = vpop.f32.mrb[0].mxu0
        %v900 = vadd.f32 0.0, %v899
        %v901 = vpop.f32.mrb[0].mxu0
        %v902 = vpop.f32.mrb[0].mxu0
        %v903 = vpop.f32.mrb[0].mxu0
        %904 = vdwg.mxu0
        %v905 = vadd.f32 %v820, %v859
        %v906 = vxor.u32 %v905, 2147483648
        %v907 = vmul.f32 %v906, 1.442695
        %v908 = vpow.pop %v907
        %v909 = vadd.f32 %v908, 1.0
        %v910 = vrcp.pop %v909
        %v911 = vmul.f32 1.0, %v910
        %v912 = vadd.f32 %v821, %v861
        %v913 = vxor.u32 %v912, 2147483648
        %v914 = vmul.f32 %v913, 1.442695
        %v915 = vpow.pop %v914
        %v916 = vadd.f32 %v915, 1.0
        %v917 = vrcp.pop %v916
        %v918 = vmul.f32 1.0, %v917
        %v919 = vadd.f32 %v900, %v344
        %v920 = vmul.f32 %v911, %v919
        %v921 = vadd.f32 %v822, %v920
        %v922 = vtanh.pop %v921
        %v923 = vsub.f32 1.0, %v918
        %v924 = vmul.f32 %v923, %v922
        %v925 = vmul.f32 %v918, %v818
        %v926 = vadd.f32 %v924, %v925
        %s927 = sadd.s32 %s347, 3
        %v928 = vstv %s927
        %vm929 = vcmp.lt.s32.totalorder %v928, %v346
        %v930 = vsel %vm929, %v926, 0.0
        %s931 = scalar_lea.vmem %s295, 24 [#allocation9]
        %932 = vst [vmem:[%s931] sm:$0xff] %v930
        %v933 = vsel %vm929, %v926, %v818
        %s934 = scalar_lea.vmem %s250, 96 [#allocation3]
        %v935 = vld [vmem:[%s934] sm:$0xff]
        %v936 = vld [vmem:[%s934 + $0x8] sm:$0xff]
        %v937 = vld [vmem:[%s934 + $0x10] sm:$0xff]
        %v938 = vpack.c.bf16 %v933, %v933
        %939 = vmatprep.subr.bf16.mxu0 %v434
        %940 = vmatpush1.bf16.msra.mxu0 %v433
        %941 = vmatprep.subr.bf16.mxu0 %v437
        %942 = vmatpush1.bf16.msra.mxu0 %v436
        %943 = vmatprep.subr.bf16.mxu0 %v440
        %944 = vmatpush1.bf16.msra.mxu0 %v439
        %945 = vmatprep.subr.bf16.mxu0 %v443
        %946 = vmatpush1.bf16.msra.mxu0 %v442
        %947 = vmatprep.subr.bf16.mxu0 %v446
        %948 = vmatpush1.bf16.msra.mxu0 %v445
        %949 = vmatprep.subr.bf16.mxu0 %v449
        %950 = vmatpush1.bf16.msra.mxu0 %v448
        %951 = vmatprep.subr.bf16.mxu0 %v452
        %952 = vmatpush1.bf16.msra.mxu0 %v451
        %953 = vmatprep.subr.bf16.mxu0 %v455
        %954 = vmatpush1.bf16.msra.mxu0 %v454
        %955 = vmatprep.subr.bf16.mxu0 0
        %956 = vmatpush1.bf16.msra.mxu0 0
        %957 = vmatprep.subr.bf16.mxu0 0
        %958 = vmatpush1.bf16.msra.mxu0 0
        %959 = vmatprep.subr.bf16.mxu0 0
        %960 = vmatpush1.bf16.msra.mxu0 0
        %961 = vmatprep.subr.bf16.mxu0 0
        %962 = vmatpush1.bf16.msra.mxu0 0
        %963 = vmatprep.subr.bf16.mxu0 0
        %964 = vmatpush1.bf16.msra.mxu0 0
        %965 = vmatprep.subr.bf16.mxu0 0
        %966 = vmatpush1.bf16.msra.mxu0 0
        %967 = vmatprep.subr.bf16.mxu0 0
        %968 = vmatpush1.bf16.msra.mxu0 0
        %969 = vmatprep.subr.bf16.mxu0 0
        %970 = vmatpush1.bf16.msra.mxu0 0
        %971 = vmatprep.mubr.bf16.mxu0 0
        %972 = vmatmul.mubr.bf16.gmra.mrb[0].mxu0 %v938
        %v973 = vpop.f32.mrb[0].mxu0
        %v974 = vadd.f32 0.0, %v973
        %v975 = vpop.f32.mrb[0].mxu0
        %v976 = vadd.f32 0.0, %v975
        %v977 = vpop.f32.mrb[0].mxu0
        %v978 = vpop.f32.mrb[0].mxu0
        %979 = vdwg.mxu0
        %980 = vmatprep.subr.bf16.mxu0 0
        %981 = vmatpush1.bf16.msra.mxu0 %v435
        %982 = vmatprep.subr.bf16.mxu0 0
        %983 = vmatpush1.bf16.msra.mxu0 %v438
        %984 = vmatprep.subr.bf16.mxu0 0
        %985 = vmatpush1.bf16.msra.mxu0 %v441
        %986 = vmatprep.subr.bf16.mxu0 0
        %987 = vmatpush1.bf16.msra.mxu0 %v444
        %988 = vmatprep.subr.bf16.mxu0 0
        %989 = vmatpush1.bf16.msra.mxu0 %v447
        %990 = vmatprep.subr.bf16.mxu0 0
        %991 = vmatpush1.bf16.msra.mxu0 %v450
        %992 = vmatprep.subr.bf16.mxu0 0
        %993 = vmatpush1.bf16.msra.mxu0 %v453
        %994 = vmatprep.subr.bf16.mxu0 0
        %995 = vmatpush1.bf16.msra.mxu0 %v456
        %996 = vmatprep.subr.bf16.mxu0 0
        %997 = vmatpush1.bf16.msra.mxu0 0
        %998 = vmatprep.subr.bf16.mxu0 0
        %999 = vmatpush1.bf16.msra.mxu0 0
        %1000 = vmatprep.subr.bf16.mxu0 0
        %1001 = vmatpush1.bf16.msra.mxu0 0
        %1002 = vmatprep.subr.bf16.mxu0 0
        %1003 = vmatpush1.bf16.msra.mxu0 0
        %1004 = vmatprep.subr.bf16.mxu0 0
        %1005 = vmatpush1.bf16.msra.mxu0 0
        %1006 = vmatprep.subr.bf16.mxu0 0
        %1007 = vmatpush1.bf16.msra.mxu0 0
        %1008 = vmatprep.subr.bf16.mxu0 0
        %1009 = vmatpush1.bf16.msra.mxu0 0
        %1010 = vmatprep.subr.bf16.mxu0 0
        %1011 = vmatpush1.bf16.msra.mxu0 0
        %1012 = vmatprep.mubr.bf16.mxu0 0
        %1013 = vmatmul.mubr.bf16.gmra.mrb[0].mxu0 %v938
        %v1014 = vpop.f32.mrb[0].mxu0
        %v1015 = vadd.f32 0.0, %v1014
        %v1016 = vpop.f32.mrb[0].mxu0
        %v1017 = vpop.f32.mrb[0].mxu0
        %v1018 = vpop.f32.mrb[0].mxu0
        %1019 = vdwg.mxu0
        %v1020 = vadd.f32 %v935, %v974
        %v1021 = vxor.u32 %v1020, 2147483648
        %v1022 = vmul.f32 %v1021, 1.442695
        %v1023 = vpow.pop %v1022
        %v1024 = vadd.f32 %v1023, 1.0
        %v1025 = vrcp.pop %v1024
        %v1026 = vmul.f32 1.0, %v1025
        %v1027 = vadd.f32 %v936, %v976
        %v1028 = vxor.u32 %v1027, 2147483648
        %v1029 = vmul.f32 %v1028, 1.442695
        %v1030 = vpow.pop %v1029
        %v1031 = vadd.f32 %v1030, 1.0
        %v1032 = vrcp.pop %v1031
        %v1033 = vmul.f32 1.0, %v1032
        %v1034 = vadd.f32 %v1015, %v344
        %v1035 = vmul.f32 %v1026, %v1034
        %v1036 = vadd.f32 %v937, %v1035
        %v1037 = vtanh.pop %v1036
        %v1038 = vsub.f32 1.0, %v1033
        %v1039 = vmul.f32 %v1038, %v1037
        %v1040 = vmul.f32 %v1033, %v933
        %v1041 = vadd.f32 %v1039, %v1040
        %s1042 = sadd.s32 %s347, 4
        %v1043 = vstv %s1042
        %vm1044 = vcmp.lt.s32.totalorder %v1043, %v346
        %v1045 = vsel %vm1044, %v1041, 0.0
        %s1046 = scalar_lea.vmem %s295, 32 [#allocation9]
        %1047 = vst [vmem:[%s1046] sm:$0xff] %v1045
        %v1048 = vsel %vm1044, %v1041, %v933
        %s1049 = scalar_lea.vmem %s250, 120 [#allocation3]
        %v1050 = vld [vmem:[%s1049] sm:$0xff]
        %v1051 = vld [vmem:[%s1049 + $0x8] sm:$0xff]
        %v1052 = vld [vmem:[%s1049 + $0x10] sm:$0xff]
        %v1053 = vpack.c.bf16 %v1048, %v1048
        %1054 = vmatprep.subr.bf16.mxu0 %v434
        %1055 = vmatpush1.bf16.msra.mxu0 %v433
        %1056 = vmatprep.subr.bf16.mxu0 %v437
        %1057 = vmatpush1.bf16.msra.mxu0 %v436
        %1058 = vmatprep.subr.bf16.mxu0 %v440
        %1059 = vmatpush1.bf16.msra.mxu0 %v439
        %1060 = vmatprep.subr.bf16.mxu0 %v443
        %1061 = vmatpush1.bf16.msra.mxu0 %v442
        %1062 = vmatprep.subr.bf16.mxu0 %v446
        %1063 = vmatpush1.bf16.msra.mxu0 %v445
        %1064 = vmatprep.subr.bf16.mxu0 %v449
        %1065 = vmatpush1.bf16.msra.mxu0 %v448
        %1066 = vmatprep.subr.bf16.mxu0 %v452
        %1067 = vmatpush1.bf16.msra.mxu0 %v451
        %1068 = vmatprep.subr.bf16.mxu0 %v455
        %1069 = vmatpush1.bf16.msra.mxu0 %v454
        %1070 = vmatprep.subr.bf16.mxu0 0
        %1071 = vmatpush1.bf16.msra.mxu0 0
        %1072 = vmatprep.subr.bf16.mxu0 0
        %1073 = vmatpush1.bf16.msra.mxu0 0
        %1074 = vmatprep.subr.bf16.mxu0 0
        %1075 = vmatpush1.bf16.msra.mxu0 0
        %1076 = vmatprep.subr.bf16.mxu0 0
        %1077 = vmatpush1.bf16.msra.mxu0 0
        %1078 = vmatprep.subr.bf16.mxu0 0
        %1079 = vmatpush1.bf16.msra.mxu0 0
        %1080 = vmatprep.subr.bf16.mxu0 0
        %1081 = vmatpush1.bf16.msra.mxu0 0
        %1082 = vmatprep.subr.bf16.mxu0 0
        %1083 = vmatpush1.bf16.msra.mxu0 0
        %1084 = vmatprep.subr.bf16.mxu0 0
        %1085 = vmatpush1.bf16.msra.mxu0 0
        %1086 = vmatprep.mubr.bf16.mxu0 0
        %1087 = vmatmul.mubr.bf16.gmra.mrb[0].mxu0 %v1053
        %v1088 = vpop.f32.mrb[0].mxu0
        %v1089 = vadd.f32 0.0, %v1088
        %v1090 = vpop.f32.mrb[0].mxu0
        %v1091 = vadd.f32 0.0, %v1090
        %v1092 = vpop.f32.mrb[0].mxu0
        %v1093 = vpop.f32.mrb[0].mxu0
        %1094 = vdwg.mxu0
        %1095 = vmatprep.subr.bf16.mxu0 0
        %1096 = vmatpush1.bf16.msra.mxu0 %v435
        %1097 = vmatprep.subr.bf16.mxu0 0
        %1098 = vmatpush1.bf16.msra.mxu0 %v438
        %1099 = vmatprep.subr.bf16.mxu0 0
        %1100 = vmatpush1.bf16.msra.mxu0 %v441
        %1101 = vmatprep.subr.bf16.mxu0 0
        %1102 = vmatpush1.bf16.msra.mxu0 %v444
        %1103 = vmatprep.subr.bf16.mxu0 0
        %1104 = vmatpush1.bf16.msra.mxu0 %v447
        %1105 = vmatprep.subr.bf16.mxu0 0
        %1106 = vmatpush1.bf16.msra.mxu0 %v450
        %1107 = vmatprep.subr.bf16.mxu0 0
        %1108 = vmatpush1.bf16.msra.mxu0 %v453
        %1109 = vmatprep.subr.bf16.mxu0 0
        %1110 = vmatpush1.bf16.msra.mxu0 %v456
        %1111 = vmatprep.subr.bf16.mxu0 0
        %1112 = vmatpush1.bf16.msra.mxu0 0
        %1113 = vmatprep.subr.bf16.mxu0 0
        %1114 = vmatpush1.bf16.msra.mxu0 0
        %1115 = vmatprep.subr.bf16.mxu0 0
        %1116 = vmatpush1.bf16.msra.mxu0 0
        %1117 = vmatprep.subr.bf16.mxu0 0
        %1118 = vmatpush1.bf16.msra.mxu0 0
        %1119 = vmatprep.subr.bf16.mxu0 0
        %1120 = vmatpush1.bf16.msra.mxu0 0
        %1121 = vmatprep.subr.bf16.mxu0 0
        %1122 = vmatpush1.bf16.msra.mxu0 0
        %1123 = vmatprep.subr.bf16.mxu0 0
        %1124 = vmatpush1.bf16.msra.mxu0 0
        %1125 = vmatprep.subr.bf16.mxu0 0
        %1126 = vmatpush1.bf16.msra.mxu0 0
        %1127 = vmatprep.mubr.bf16.mxu0 0
        %1128 = vmatmul.mubr.bf16.gmra.mrb[0].mxu0 %v1053
        %v1129 = vpop.f32.mrb[0].mxu0
        %v1130 = vadd.f32 0.0, %v1129
        %v1131 = vpop.f32.mrb[0].mxu0
        %v1132 = vpop.f32.mrb[0].mxu0
        %v1133 = vpop.f32.mrb[0].mxu0
        %1134 = vdwg.mxu0
        %v1135 = vadd.f32 %v1050, %v1089
        %v1136 = vxor.u32 %v1135, 2147483648
        %v1137 = vmul.f32 %v1136, 1.442695
        %v1138 = vpow.pop %v1137
        %v1139 = vadd.f32 %v1138, 1.0
        %v1140 = vrcp.pop %v1139
        %v1141 = vmul.f32 1.0, %v1140
        %v1142 = vadd.f32 %v1051, %v1091
        %v1143 = vxor.u32 %v1142, 2147483648
        %v1144 = vmul.f32 %v1143, 1.442695
        %v1145 = vpow.pop %v1144
        %v1146 = vadd.f32 %v1145, 1.0
        %v1147 = vrcp.pop %v1146
        %v1148 = vmul.f32 1.0, %v1147
        %v1149 = vadd.f32 %v1130, %v344
        %v1150 = vmul.f32 %v1141, %v1149
        %v1151 = vadd.f32 %v1052, %v1150
        %v1152 = vtanh.pop %v1151
        %v1153 = vsub.f32 1.0, %v1148
        %v1154 = vmul.f32 %v1153, %v1152
        %v1155 = vmul.f32 %v1148, %v1048
        %v1156 = vadd.f32 %v1154, %v1155
        %s1157 = sadd.s32 %s347, 5
        %v1158 = vstv %s1157
        %vm1159 = vcmp.lt.s32.totalorder %v1158, %v346
        %v1160 = vsel %vm1159, %v1156, 0.0
        %s1161 = scalar_lea.vmem %s295, 40 [#allocation9]
        %1162 = vst [vmem:[%s1161] sm:$0xff] %v1160
        %v1163 = vsel %vm1159, %v1156, %v1048
        %s1164 = scalar_lea.vmem %s250, 144 [#allocation3]
        %v1165 = vld [vmem:[%s1164] sm:$0xff]
        %v1166 = vld [vmem:[%s1164 + $0x8] sm:$0xff]
        %v1167 = vld [vmem:[%s1164 + $0x10] sm:$0xff]
        %v1168 = vpack.c.bf16 %v1163, %v1163
        %1169 = vmatprep.subr.bf16.mxu0 %v434
        %1170 = vmatpush1.bf16.msra.mxu0 %v433
        %1171 = vmatprep.subr.bf16.mxu0 %v437
        %1172 = vmatpush1.bf16.msra.mxu0 %v436
        %1173 = vmatprep.subr.bf16.mxu0 %v440
        %1174 = vmatpush1.bf16.msra.mxu0 %v439
        %1175 = vmatprep.subr.bf16.mxu0 %v443
        %1176 = vmatpush1.bf16.msra.mxu0 %v442
        %1177 = vmatprep.subr.bf16.mxu0 %v446
        %1178 = vmatpush1.bf16.msra.mxu0 %v445
        %1179 = vmatprep.subr.bf16.mxu0 %v449
        %1180 = vmatpush1.bf16.msra.mxu0 %v448
        %1181 = vmatprep.subr.bf16.mxu0 %v452
        %1182 = vmatpush1.bf16.msra.mxu0 %v451
        %1183 = vmatprep.subr.bf16.mxu0 %v455
        %1184 = vmatpush1.bf16.msra.mxu0 %v454
        %1185 = vmatprep.subr.bf16.mxu0 0
        %1186 = vmatpush1.bf16.msra.mxu0 0
        %1187 = vmatprep.subr.bf16.mxu0 0
        %1188 = vmatpush1.bf16.msra.mxu0 0
        %1189 = vmatprep.subr.bf16.mxu0 0
        %1190 = vmatpush1.bf16.msra.mxu0 0
        %1191 = vmatprep.subr.bf16.mxu0 0
        %1192 = vmatpush1.bf16.msra.mxu0 0
        %1193 = vmatprep.subr.bf16.mxu0 0
        %1194 = vmatpush1.bf16.msra.mxu0 0
        %1195 = vmatprep.subr.bf16.mxu0 0
        %1196 = vmatpush1.bf16.msra.mxu0 0
        %1197 = vmatprep.subr.bf16.mxu0 0
        %1198 = vmatpush1.bf16.msra.mxu0 0
        %1199 = vmatprep.subr.bf16.mxu0 0
        %1200 = vmatpush1.bf16.msra.mxu0 0
        %1201 = vmatprep.mubr.bf16.mxu0 0
        %1202 = vmatmul.mubr.bf16.gmra.mrb[0].mxu0 %v1168
        %v1203 = vpop.f32.mrb[0].mxu0
        %v1204 = vadd.f32 0.0, %v1203
        %v1205 = vpop.f32.mrb[0].mxu0
        %v1206 = vadd.f32 0.0, %v1205
        %v1207 = vpop.f32.mrb[0].mxu0
        %v1208 = vpop.f32.mrb[0].mxu0
        %1209 = vdwg.mxu0
        %1210 = vmatprep.subr.bf16.mxu0 0
        %1211 = vmatpush1.bf16.msra.mxu0 %v435
        %1212 = vmatprep.subr.bf16.mxu0 0
        %1213 = vmatpush1.bf16.msra.mxu0 %v438
        %1214 = vmatprep.subr.bf16.mxu0 0
        %1215 = vmatpush1.bf16.msra.mxu0 %v441
        %1216 = vmatprep.subr.bf16.mxu0 0
        %1217 = vmatpush1.bf16.msra.mxu0 %v444
        %1218 = vmatprep.subr.bf16.mxu0 0
        %1219 = vmatpush1.bf16.msra.mxu0 %v447
        %1220 = vmatprep.subr.bf16.mxu0 0
        %1221 = vmatpush1.bf16.msra.mxu0 %v450
        %1222 = vmatprep.subr.bf16.mxu0 0
        %1223 = vmatpush1.bf16.msra.mxu0 %v453
        %1224 = vmatprep.subr.bf16.mxu0 0
        %1225 = vmatpush1.bf16.msra.mxu0 %v456
        %1226 = vmatprep.subr.bf16.mxu0 0
        %1227 = vmatpush1.bf16.msra.mxu0 0
        %1228 = vmatprep.subr.bf16.mxu0 0
        %1229 = vmatpush1.bf16.msra.mxu0 0
        %1230 = vmatprep.subr.bf16.mxu0 0
        %1231 = vmatpush1.bf16.msra.mxu0 0
        %1232 = vmatprep.subr.bf16.mxu0 0
        %1233 = vmatpush1.bf16.msra.mxu0 0
        %1234 = vmatprep.subr.bf16.mxu0 0
        %1235 = vmatpush1.bf16.msra.mxu0 0
        %1236 = vmatprep.subr.bf16.mxu0 0
        %1237 = vmatpush1.bf16.msra.mxu0 0
        %1238 = vmatprep.subr.bf16.mxu0 0
        %1239 = vmatpush1.bf16.msra.mxu0 0
        %1240 = vmatprep.subr.bf16.mxu0 0
        %1241 = vmatpush1.bf16.msra.mxu0 0
        %1242 = vmatprep.mubr.bf16.mxu0 0
        %1243 = vmatmul.mubr.bf16.gmra.mrb[0].mxu0 %v1168
        %v1244 = vpop.f32.mrb[0].mxu0
        %v1245 = vadd.f32 0.0, %v1244
        %v1246 = vpop.f32.mrb[0].mxu0
        %v1247 = vpop.f32.mrb[0].mxu0
        %v1248 = vpop.f32.mrb[0].mxu0
        %1249 = vdwg.mxu0
        %v1250 = vadd.f32 %v1165, %v1204
        %v1251 = vxor.u32 %v1250, 2147483648
        %v1252 = vmul.f32 %v1251, 1.442695
        %v1253 = vpow.pop %v1252
        %v1254 = vadd.f32 %v1253, 1.0
        %v1255 = vrcp.pop %v1254
        %v1256 = vmul.f32 1.0, %v1255
        %v1257 = vadd.f32 %v1166, %v1206
        %v1258 = vxor.u32 %v1257, 2147483648
        %v1259 = vmul.f32 %v1258, 1.442695
        %v1260 = vpow.pop %v1259
        %v1261 = vadd.f32 %v1260, 1.0
        %v1262 = vrcp.pop %v1261
        %v1263 = vmul.f32 1.0, %v1262
        %v1264 = vadd.f32 %v1245, %v344
        %v1265 = vmul.f32 %v1256, %v1264
        %v1266 = vadd.f32 %v1167, %v1265
        %v1267 = vtanh.pop %v1266
        %v1268 = vsub.f32 1.0, %v1263
        %v1269 = vmul.f32 %v1268, %v1267
        %v1270 = vmul.f32 %v1263, %v1163
        %v1271 = vadd.f32 %v1269, %v1270
        %s1272 = sadd.s32 %s347, 6
        %v1273 = vstv %s1272
        %vm1274 = vcmp.lt.s32.totalorder %v1273, %v346
        %v1275 = vsel %vm1274, %v1271, 0.0
        %s1276 = scalar_lea.vmem %s295, 48 [#allocation9]
        %1277 = vst [vmem:[%s1276] sm:$0xff] %v1275
        %v1278 = vsel %vm1274, %v1271, %v1163
        %s1279 = scalar_lea.vmem %s250, 168 [#allocation3]
        %v1280 = vld [vmem:[%s1279] sm:$0xff]
        %v1281 = vld [vmem:[%s1279 + $0x8] sm:$0xff]
        %v1282 = vld [vmem:[%s1279 + $0x10] sm:$0xff]
        %v1283 = vpack.c.bf16 %v1278, %v1278
        %1284 = vmatprep.subr.bf16.mxu0 %v434
        %1285 = vmatpush1.bf16.msra.mxu0 %v433
        %1286 = vmatprep.subr.bf16.mxu0 %v437
        %1287 = vmatpush1.bf16.msra.mxu0 %v436
        %1288 = vmatprep.subr.bf16.mxu0 %v440
        %1289 = vmatpush1.bf16.msra.mxu0 %v439
        %1290 = vmatprep.subr.bf16.mxu0 %v443
        %1291 = vmatpush1.bf16.msra.mxu0 %v442
        %1292 = vmatprep.subr.bf16.mxu0 %v446
        %1293 = vmatpush1.bf16.msra.mxu0 %v445
        %1294 = vmatprep.subr.bf16.mxu0 %v449
        %1295 = vmatpush1.bf16.msra.mxu0 %v448
        %1296 = vmatprep.subr.bf16.mxu0 %v452
        %1297 = vmatpush1.bf16.msra.mxu0 %v451
        %1298 = vmatprep.subr.bf16.mxu0 %v455
        %1299 = vmatpush1.bf16.msra.mxu0 %v454
        %1300 = vmatprep.subr.bf16.mxu0 0
        %1301 = vmatpush1.bf16.msra.mxu0 0
        %1302 = vmatprep.subr.bf16.mxu0 0
        %1303 = vmatpush1.bf16.msra.mxu0 0
        %1304 = vmatprep.subr.bf16.mxu0 0
        %1305 = vmatpush1.bf16.msra.mxu0 0
        %1306 = vmatprep.subr.bf16.mxu0 0
        %1307 = vmatpush1.bf16.msra.mxu0 0
        %1308 = vmatprep.subr.bf16.mxu0 0
        %1309 = vmatpush1.bf16.msra.mxu0 0
        %1310 = vmatprep.subr.bf16.mxu0 0
        %1311 = vmatpush1.bf16.msra.mxu0 0
        %1312 = vmatprep.subr.bf16.mxu0 0
        %1313 = vmatpush1.bf16.msra.mxu0 0
        %1314 = vmatprep.subr.bf16.mxu0 0
        %1315 = vmatpush1.bf16.msra.mxu0 0
        %1316 = vmatprep.mubr.bf16.mxu0 0
        %1317 = vmatmul.mubr.bf16.gmra.mrb[0].mxu0 %v1283
        %v1318 = vpop.f32.mrb[0].mxu0
        %v1319 = vadd.f32 0.0, %v1318
        %v1320 = vpop.f32.mrb[0].mxu0
        %v1321 = vadd.f32 0.0, %v1320
        %v1322 = vpop.f32.mrb[0].mxu0
        %v1323 = vpop.f32.mrb[0].mxu0
        %1324 = vdwg.mxu0
        %1325 = vmatprep.subr.bf16.mxu0 0
        %1326 = vmatpush1.bf16.msra.mxu0 %v435
        %1327 = vmatprep.subr.bf16.mxu0 0
        %1328 = vmatpush1.bf16.msra.mxu0 %v438
        %1329 = vmatprep.subr.bf16.mxu0 0
        %1330 = vmatpush1.bf16.msra.mxu0 %v441
        %1331 = vmatprep.subr.bf16.mxu0 0
        %1332 = vmatpush1.bf16.msra.mxu0 %v444
        %1333 = vmatprep.subr.bf16.mxu0 0
        %1334 = vmatpush1.bf16.msra.mxu0 %v447
        %1335 = vmatprep.subr.bf16.mxu0 0
        %1336 = vmatpush1.bf16.msra.mxu0 %v450
        %1337 = vmatprep.subr.bf16.mxu0 0
        %1338 = vmatpush1.bf16.msra.mxu0 %v453
        %1339 = vmatprep.subr.bf16.mxu0 0
        %1340 = vmatpush1.bf16.msra.mxu0 %v456
        %1341 = vmatprep.subr.bf16.mxu0 0
        %1342 = vmatpush1.bf16.msra.mxu0 0
        %1343 = vmatprep.subr.bf16.mxu0 0
        %1344 = vmatpush1.bf16.msra.mxu0 0
        %1345 = vmatprep.subr.bf16.mxu0 0
        %1346 = vmatpush1.bf16.msra.mxu0 0
        %1347 = vmatprep.subr.bf16.mxu0 0
        %1348 = vmatpush1.bf16.msra.mxu0 0
        %1349 = vmatprep.subr.bf16.mxu0 0
        %1350 = vmatpush1.bf16.msra.mxu0 0
        %1351 = vmatprep.subr.bf16.mxu0 0
        %1352 = vmatpush1.bf16.msra.mxu0 0
        %1353 = vmatprep.subr.bf16.mxu0 0
        %1354 = vmatpush1.bf16.msra.mxu0 0
        %1355 = vmatprep.subr.bf16.mxu0 0
        %1356 = vmatpush1.bf16.msra.mxu0 0
        %1357 = vmatprep.mubr.bf16.mxu0 0
        %1358 = vmatmul.mubr.bf16.gmra.mrb[0].mxu0 %v1283
        %v1359 = vpop.f32.mrb[0].mxu0
        %v1360 = vadd.f32 0.0, %v1359
        %v1361 = vpop.f32.mrb[0].mxu0
        %v1362 = vpop.f32.mrb[0].mxu0
        %v1363 = vpop.f32.mrb[0].mxu0
        %1364 = vdwg.mxu0
        %v1365 = vadd.f32 %v1280, %v1319
        %v1366 = vxor.u32 %v1365, 2147483648
        %v1367 = vmul.f32 %v1366, 1.442695
        %v1368 = vpow.pop %v1367
        %v1369 = vadd.f32 %v1368, 1.0
        %v1370 = vrcp.pop %v1369
        %v1371 = vmul.f32 1.0, %v1370
        %v1372 = vadd.f32 %v1281, %v1321
        %v1373 = vxor.u32 %v1372, 2147483648
        %v1374 = vmul.f32 %v1373, 1.442695
        %v1375 = vpow.pop %v1374
        %v1376 = vadd.f32 %v1375, 1.0
        %v1377 = vrcp.pop %v1376
        %v1378 = vmul.f32 1.0, %v1377
        %v1379 = vadd.f32 %v1360, %v344
        %v1380 = vmul.f32 %v1371, %v1379
        %v1381 = vadd.f32 %v1282, %v1380
        %v1382 = vtanh.pop %v1381
        %v1383 = vsub.f32 1.0, %v1378
        %v1384 = vmul.f32 %v1383, %v1382
        %v1385 = vmul.f32 %v1378, %v1278
        %v1386 = vadd.f32 %v1384, %v1385
        %s1387 = sadd.s32 %s347, 7
        %v1388 = vstv %s1387
        %vm1389 = vcmp.lt.s32.totalorder %v1388, %v346
        %v1390 = vsel %vm1389, %v1386, 0.0
        %s1391 = scalar_lea.vmem %s295, 56 [#allocation9]
        %1392 = vst [vmem:[%s1391] sm:$0xff] %v1390
        %v1393 = vsel %vm1389, %v1386, %v1278
        %1394 = vst [vmem:[#allocation2] sm:$0xff] %v1393
        %s1395 = sand.u32 %s145, 1
        %s1396 = scalar_lea.sflag [#allocation5], %s1395
        %s1397 = sand.u32 %s145, 1
        %s1398 = smul.addr %s1397, 64
        %s1399 = scalar_lea.vmem [#allocation9], %s1398
        // Predicated region
        $region53: #{tpu_custom_call.1} parent=35 // pred_check
          %p1400 = pneg %p155
        $region54: #{tpu_custom_call.1} parent=35 // pred_check_branch
          %1402 = sbr.rel (%p1400) target = $region56
        $region55: #{tpu_custom_call.1} parent=35 // pred_region
          %s1403 = smul.u32 8, %s27
          %s1405 = ssub.s32 1024, 1024
          %1406 = vsyncadd %s1396, %s1405
          %s1407 = smul.addr %s26, 8
          %s1408 = sadd.s32 %s1403, %s1407
          %s1409 = smul.addr %s1408, 128
          %s1410 = scalar_lea.hbm %s4, %s1409
          %s1411 = sshll.u32 %s1399, 4
          %s1412 = int_to_ptr.vmem [resolvable:$true] %s1411
          %1417 = dma.vmem_to_hbm [thread:$0]  %s1412, 1024, %s1410, %s1396, 128, 128, 8
        $region56: #{tpu_custom_call.1} parent=35 // pred_fallthru
          _
      $region36: #{tpu_custom_call.1} parent=5 // pred_fallthru
        _
      %p1418 = scmp.le.s32.totalorder 2, %s17
      // Predicated region
      $region57: #{tpu_custom_call.1} parent=5 // pred_check
        %p1419 = pneg %p1418
      $region58: #{tpu_custom_call.1} parent=5 // pred_check_branch
        %1421 = sbr.rel (%p1419) target = $region60
      $region59: #{tpu_custom_call.1} parent=5 // pred_region
        %s1422 = ssub.s32 %s17, 2
        // Predicated region
        $region61: #{tpu_custom_call.1} parent=59 // pred_check
          %p1423 = pneg %p161
        $region62: #{tpu_custom_call.1} parent=59 // pred_check_branch
          %1425 = sbr.rel (%p1423) target = $region64
        $region63: #{tpu_custom_call.1} parent=59 // pred_region
          %s1426 = sand.u32 %s146, 1
          %s1427 = scalar_lea.sflag [#allocation5], %s1426
          %s1428 = sand.u32 %s146, 1
          %s1429 = smul.addr %s1428, 64
          %s1430 = scalar_lea.vmem [#allocation9], %s1429
          %1431 = dma.done %s1427, 1024
        $region64: #{tpu_custom_call.1} parent=59 // pred_fallthru
          _
      $region60: #{tpu_custom_call.1} parent=5 // pred_fallthru
        _
    $region6: #{tpu_custom_call.1} parent=1 // loop_footer
      %s21 = sadd.s32 1, %s17
    $region7: #{tpu_custom_call.1} parent=1 // loop_footer_branch
      %16 = sbr.rel target = $region3
    $region8: #{tpu_custom_call.1} parent=1 // loop_exit
      _
    %1432 = vsyncpa [#allocation4], 1
    %s1433 = scalar_lea.sflag [#allocation4], 1
    %1434 = vsyncpa %s1433, 1
    %1435 = vsyncpa [#allocation7], 1
    %1436 = vsyncpa [#allocation5], 1
    %s1437 = scalar_lea.sflag [#allocation5], 1
    %1438 = vsyncpa %s1437, 1

</llo_original>
